<compile_context>
chip_gen: v6e
topology: v6e:2x2x1
jax: 0.10.0
libtpu: 0.0.40
codegen_flags: <defaults>
</compile_context>

<pallas_src>
import functools

import jax
import jax.numpy as jnp
from jax.experimental import pallas as pl
from jax.experimental.pallas import tpu as pltpu

BLOCK_N = 512                          # node tile (sweep 512-1024; 256 is overhead-bound)
LANE = 128                             # pad every feature dim to 128 lanes
H_RESIDENT_BUDGET = 32 * 1024 * 1024   # VMEM budget (incl. buffering) for a resident bf16 H


def _round_up(x, m):
    return (x + m - 1) // m * m


def _pad2(a, rows, cols):
    return jnp.pad(a, ((0, rows - a.shape[0]), (0, cols - a.shape[1])))


def _vmem_limit_bytes():
    # Generation-aware: ~96 MiB on v5e/v6e (128 MiB physical VMEM),
    # ~48 MiB on v7x (64 MiB per TensorCore). Conservative fallback if the
    # query is unavailable.
    try:
        cap = pltpu.get_tpu_info().vmem_capacity_bytes
    except Exception:
        cap = 64 * 1024 * 1024
    return min(int(cap * 3 // 4), 100 * 1024 * 1024)


def _compiler_params(sem):
    return pltpu.CompilerParams(dimension_semantics=sem,
                                vmem_limit_bytes=_vmem_limit_bytes())


# ---------------------------------------------------------------------------
# Kernels
# ---------------------------------------------------------------------------
def linear_kernel(x_ref, w_ref, b_ref, out_ref):
    """One row tile of out = x @ W + b (bf16 inputs, f32 accumulate, bf16 out)."""
    h = jnp.dot(x_ref[...], w_ref[...], preferred_element_type=jnp.float32)
    out_ref[...] = (h + b_ref[...]).astype(out_ref.dtype)


def gcn_aggregate_kernel(adj_ref, hsrc_ref, hdst_ref, invdeg_ref,
                         out_ref, acc_ref, *, tk, hsrc_resident):
    """out = relu((counts @ H) * 1/deg) + H, tiled over (dst tiles, src blocks)."""
    k = pl.program_id(1)

    @pl.when(k == 0)
    def _():
        acc_ref[...] = jnp.zeros_like(acc_ref)

    if hsrc_resident:
        off = pl.multiple_of(k * tk, tk)
        h_blk = hsrc_ref[pl.ds(off, tk), :]     # H resident in VMEM, sliced per step
    else:
        h_blk = hsrc_ref[...]                   # streamed (tk, f) block
    # bf16 x bf16 MXU matmul, f32 accumulate (counts are exact integers in bf16).
    acc_ref[...] += jnp.dot(adj_ref[...], h_blk,
                            preferred_element_type=jnp.float32)

    @pl.when(k == pl.num_programs(1) - 1)
    def _():
        # f32 per-dst-row 1/deg scale at finalize (exact mean aggregation),
        # then relu + residual, stored lane-dense in bf16.
        agg = jnp.maximum(acc_ref[...] * invdeg_ref[...], 0.0)
        out_ref[...] = (agg + hdst_ref[...].astype(jnp.float32)).astype(out_ref.dtype)


def gcn_aggregate_decode_kernel(adj_ref, hsrc_ref, hdst_ref, invdeg_ref,
                                wd1_ref, bd1_ref, wd2_ref, bd2_ref,
                                xhat_ref, z_ref, acc_ref, *, tk, hsrc_resident):
    """Second GCN aggregation fused with the row-local MLP decoder."""
    k = pl.program_id(1)

    @pl.when(k == 0)
    def _():
        acc_ref[...] = jnp.zeros_like(acc_ref)

    if hsrc_resident:
        off = pl.multiple_of(k * tk, tk)
        h_blk = hsrc_ref[pl.ds(off, tk), :]
    else:
        h_blk = hsrc_ref[...]
    acc_ref[...] += jnp.dot(adj_ref[...], h_blk,
                            preferred_element_type=jnp.float32)

    @pl.when(k == pl.num_programs(1) - 1)
    def _():
        agg = jnp.maximum(acc_ref[...] * invdeg_ref[...], 0.0)
        z = agg + hdst_ref[...].astype(jnp.float32)
        z_ref[...] = z
        # Decoder matmuls on the bf16 MXU path (weights resident in bf16).
        d1 = jnp.maximum(
            jnp.dot(z.astype(jnp.bfloat16), wd1_ref[...],
                    preferred_element_type=jnp.float32) + bd1_ref[...], 0.0)
        xhat_ref[...] = (
            jnp.dot(d1.astype(jnp.bfloat16), wd2_ref[...],
                    preferred_element_type=jnp.float32) + bd2_ref[...])


# ---------------------------------------------------------------------------
# pallas_call wrappers
# ---------------------------------------------------------------------------
def _linear(x, w, b, *, tm):
    n, din = x.shape
    dout = w.shape[1]
    return pl.pallas_call(
        linear_kernel,
        out_shape=jax.ShapeDtypeStruct((n, dout), jnp.bfloat16),
        grid=(n // tm,),
        in_specs=[
            pl.BlockSpec((tm, din), lambda i: (i, 0)),
            pl.BlockSpec((din, dout), lambda i: (0, 0)),   # resident bf16 weight
            pl.BlockSpec((1, dout), lambda i: (0, 0)),     # resident f32 bias
        ],
        out_specs=pl.BlockSpec((tm, dout), lambda i: (i, 0)),
        compiler_params=_compiler_params(("parallel",)),
    )(x, w, b)


def _hsrc_plan(n, f, tk, itemsize):
    """Keep H fully VMEM-resident when it (double-buffered) fits the budget."""
    resident = n * f * itemsize * 2 <= H_RESIDENT_BUDGET
    if resident:
        return pl.BlockSpec((n, f), lambda i, k: (0, 0)), True
    return pl.BlockSpec((tk, f), lambda i, k: (k, 0)), False


def _aggregate(counts, h, inv_deg, *, tm, tk):
    n, f = h.shape
    hsrc_spec, resident = _hsrc_plan(n, f, tk, h.dtype.itemsize)
    return pl.pallas_call(
        functools.partial(gcn_aggregate_kernel, tk=tk, hsrc_resident=resident),
        out_shape=jax.ShapeDtypeStruct((n, f), jnp.bfloat16),
        grid=(n // tm, n // tk),
        in_specs=[
            pl.BlockSpec((tm, tk), lambda i, k: (i, k)),   # bf16 exact-count tile
            hsrc_spec,                                     # H (resident or streamed)
            pl.BlockSpec((tm, f), lambda i, k: (i, 0)),    # H rows of dst tile (residual)
            pl.BlockSpec((tm, 1), lambda i, k: (i, 0)),    # f32 1/deg per dst row
        ],
        out_specs=pl.BlockSpec((tm, f), lambda i, k: (i, 0)),
        scratch_shapes=[pltpu.VMEM((tm, f), jnp.float32)],
        compiler_params=_compiler_params(("parallel", "arbitrary")),
    )(counts, h, h, inv_deg)


def _aggregate_decode(counts, h, inv_deg, wd1, bd1, wd2, bd2, *, tm, tk):
    n, f = h.shape
    dh = wd1.shape[1]
    dout = wd2.shape[1]
    hsrc_spec, resident = _hsrc_plan(n, f, tk, h.dtype.itemsize)
    xhat, z = pl.pallas_call(
        functools.partial(gcn_aggregate_decode_kernel, tk=tk,
                          hsrc_resident=resident),
        out_shape=(jax.ShapeDtypeStruct((n, dout), jnp.float32),
                   jax.ShapeDtypeStruct((n, f), jnp.float32)),
        grid=(n // tm, n // tk),
        in_specs=[
            pl.BlockSpec((tm, tk), lambda i, k: (i, k)),
            hsrc_spec,
            pl.BlockSpec((tm, f), lambda i, k: (i, 0)),
            pl.BlockSpec((tm, 1), lambda i, k: (i, 0)),
            pl.BlockSpec((f, dh), lambda i, k: (0, 0)),    # resident bf16 decoder W1
            pl.BlockSpec((1, dh), lambda i, k: (0, 0)),
            pl.BlockSpec((dh, dout), lambda i, k: (0, 0)), # resident bf16 decoder W2
            pl.BlockSpec((1, dout), lambda i, k: (0, 0)),
        ],
        out_specs=(pl.BlockSpec((tm, dout), lambda i, k: (i, 0)),
                   pl.BlockSpec((tm, f), lambda i, k: (i, 0))),
        scratch_shapes=[pltpu.VMEM((tm, f), jnp.float32)],
        compiler_params=_compiler_params(("parallel", "arbitrary")),
    )(counts, h, h, inv_deg, wd1, bd1, wd2, bd2)
    return xhat, z


# ---------------------------------------------------------------------------
# Graph precompute (hoistable / cacheable — depends only on edge_index)
# ---------------------------------------------------------------------------
def precompute_graph(edge_index, num_nodes, *, block_n=None):
    """Dense exact edge-count matrix (bf16) + f32 inverse in-degree column."""
    n = int(num_nodes)
    if block_n is None:
        block_n = min(BLOCK_N, _round_up(n, LANE))
    np_ = _round_up(n, block_n)
    src, dst = edge_index[0], edge_index[1]
    # Exact integer counts, built directly in bf16 (exact for multiplicity <= 256;
    # no O(N^2) f32 intermediate). Padded rows/cols stay zero.
    counts = jnp.zeros((np_, np_), jnp.bfloat16).at[dst, src].add(
        jnp.ones(src.shape, jnp.bfloat16))
    # O(E) degree scatter; nodes with no in-edges get scale 1 (their row is zero).
    deg = jnp.zeros((np_,), jnp.float32).at[dst].add(1.0)
    inv_deg = (1.0 / jnp.where(deg == 0.0, 1.0, deg)).reshape(np_, 1)
    # TODO(synk): on v7x, store counts in fp8_e4m3 (exact for multiplicity <= 15)
    # to halve the dominant A HBM stream.
    # TODO(synk): for truly sparse graphs, replace the dense A @ H with a CSR
    # gather via PrefetchScalarGridSpec instead of an O(N^2) adjacency matmul.
    return counts, inv_deg


# ---------------------------------------------------------------------------
# Forward
# ---------------------------------------------------------------------------
def graph_autoencoder_apply(x, graph, params):
    """x: [N, input_dim] f32; graph: (counts_bf16 [Np,Np], inv_deg [Np,1] f32)."""
    counts, inv_deg = graph
    n, input_dim = x.shape
    np_ = counts.shape[0]
    tm = tk = min(BLOCK_N, np_)
    assert np_ % tm == 0

    (w1, b1), (w2, b2), (wd1, bd1), (wd2, bd2) = params
    hidden, latent, dec_hidden = w1.shape[1], w2.shape[1], wd1.shape[1]

    fin_p = _round_up(input_dim, LANE)
    fh_p = _round_up(hidden, LANE)
    fl_p = _round_up(latent, LANE)
    fd_p = _round_up(dec_hidden, LANE)

    # Lane-dense padding; activations & weights in bf16, biases in f32.
    # (Padded zero rows pick up the bias in the linear kernels; harmless because
    # padded adjacency columns are zero and outputs are sliced back to [:n].)
    x_p = _pad2(x, np_, fin_p).astype(jnp.bfloat16)
    w1_p, b1_p = _pad2(w1, fin_p, fh_p).astype(jnp.bfloat16), _pad2(b1, 1, fh_p)
    w2_p, b2_p = _pad2(w2, fh_p, fl_p).astype(jnp.bfloat16), _pad2(b2, 1, fl_p)
    wd1_p, bd1_p = _pad2(wd1, fl_p, fd_p).astype(jnp.bfloat16), _pad2(bd1, 1, fd_p)
    wd2_p, bd2_p = _pad2(wd2, fd_p, fin_p).astype(jnp.bfloat16), _pad2(bd2, 1, fin_p)

    h1 = _linear(x_p, w1_p, b1_p, tm=tm)                     # X @ W1 + b1      (bf16)
    x1 = _aggregate(counts, h1, inv_deg, tm=tm, tk=tk)       # relu(mean)+H1    (bf16)
    h2 = _linear(x1, w2_p, b2_p, tm=tm)                      # X1 @ W2 + b2     (bf16)
    xhat_p, z_p = _aggregate_decode(counts, h2, inv_deg,
                                    wd1_p, bd1_p, wd2_p, bd2_p,
                                    tm=tm, tk=tk)            # GCN2 + decoder   (f32)

    return xhat_p[:n, :input_dim], z_p[:n, :latent]


def graph_autoencoder_forward(x, edge_index, params):
    """Drop-in forward: builds the dense graph operator then applies the kernels."""
    graph = precompute_graph(edge_index, x.shape[0])
    return graph_autoencoder_apply(x, graph, params)


# ---------------------------------------------------------------------------
# Params / reference / demo
# ---------------------------------------------------------------------------
def init_params(key, input_dim, gcn_hidden_dim, latent_dim, decoder_hidden_dim):
    """Deterministic parameter init; weights stored as [in, out]."""
    dims = [
        (input_dim, gcn_hidden_dim),       # encoder GCN layer 1
        (gcn_hidden_dim, latent_dim),      # encoder GCN layer 2
        (latent_dim, decoder_hidden_dim),  # decoder fc1
        (decoder_hidden_dim, input_dim),   # decoder fc2
    ]
    params = []
    for (din, dout) in dims:
        key, kw, kb = jax.random.split(key, 3)
        bound = 1.0 / jnp.sqrt(din)
        w = jax.random.uniform(kw, (din, dout), jnp.float32, -bound, bound)
        b = jax.random.uniform(kb, (1, dout), jnp.float32, -bound, bound)
        params.append((w, b))
    return params


def _reference_forward(x, edge_index, params):
    """Pure-JAX f32 reference of the PyTorch module."""
    n = x.shape[0]
    src, dst = edge_index[0], edge_index[1]
    counts = jnp.zeros((n, n), jnp.float32).at[dst, src].add(1.0)
    deg = counts.sum(axis=1, keepdims=True)
    adj = counts / jnp.where(deg == 0.0, 1.0, deg)
    (w1, b1), (w2, b2), (wd1, bd1), (wd2, bd2) = params
    h1 = x @ w1 + b1
    x1 = jnp.maximum(adj @ h1, 0.0) + h1
    h2 = x1 @ w2 + b2
    z = jnp.maximum(adj @ h2, 0.0) + h2
    d1 = jnp.maximum(z @ wd1 + bd1, 0.0)
    return d1 @ wd2 + bd2, z


if __name__ == "__main__":
    # Small shapes consistent with the module.
    N = 16
    E = 32
    input_dim = 8
    gcn_hidden_dim = 16
    latent_dim = 8
    decoder_hidden_dim = 32

    key = jax.random.PRNGKey(0)
    key, kx, ks, kd = jax.random.split(key, 4)

    x = jax.random.normal(kx, (N, input_dim), jnp.float32)
    src = jax.random.randint(ks, (E,), 0, N, jnp.int32)
    dst = jax.random.randint(kd, (E,), 0, N, jnp.int32)
    edge_index = jnp.stack([src, dst], axis=0)           # [2, E]

    params = init_params(key, input_dim, gcn_hidden_dim, latent_dim,
                         decoder_hidden_dim)

    # Graph operator is hoisted out of the per-call forward and cached.
    graph = jax.block_until_ready(precompute_graph(edge_index, N))
    fwd = jax.jit(graph_autoencoder_apply)
    x_hat, z = fwd(x, graph, params)
    jax.block_until_ready((x_hat, z))

    assert x_hat.shape == (N, input_dim)
    assert z.shape == (N, latent_dim)

    # Validate against the f32 reference (bf16 activations/weights -> loose tol;
    # exact bf16 counts + f32 1/deg keep the aggregation itself near-f32).
    x_hat_ref, z_ref = _reference_forward(x, edge_index, params)
    assert jnp.allclose(z, z_ref, atol=1e-1, rtol=1e-1)
    assert jnp.allclose(x_hat, x_hat_ref, atol=1e-1, rtol=1e-1)

    print("KERNEL_OK")
</pallas_src>

<mosaic_0001>
module attributes {stable_mosaic.version = 11 : i64} {
  func.func @linear_kernel(%arg0: i32, %arg1: memref<128x128xbf16, #tpu.memory_space<vmem>>, %arg2: memref<128x128xbf16, #tpu.memory_space<vmem>>, %arg3: memref<1x128xf32, #tpu.memory_space<vmem>>, %arg4: memref<128x128xbf16, #tpu.memory_space<vmem>>) attributes {dimension_semantics = [#tpu.dimension_semantics<parallel>], iteration_bounds = array<i64: 1>, scalar_prefetch = 0 : i64, scratch_operands = 0 : i64, tpu.core_type = #tpu.core_type<tc>, window_params = [{transform_indices = @transform_0, window_bounds = array<i64: 128, 128>}, {pipeline_mode = #tpu.pipeline_mode<synchronous>, transform_indices = @transform_1, window_bounds = array<i64: 128, 128>}, {pipeline_mode = #tpu.pipeline_mode<synchronous>, transform_indices = @transform_2, window_bounds = array<i64: 1, 128>}, {transform_indices = @transform_3, window_bounds = array<i64: 128, 128>}]} {
    %c0 = arith.constant 0 : index
    %c0_0 = arith.constant 0 : index
    %0 = vector.load %arg1[%c0, %c0_0] : memref<128x128xbf16, #tpu.memory_space<vmem>>, vector<128x128xbf16>
    %c0_1 = arith.constant 0 : index
    %c0_2 = arith.constant 0 : index
    %1 = vector.load %arg2[%c0_1, %c0_2] : memref<128x128xbf16, #tpu.memory_space<vmem>>, vector<128x128xbf16>
    %cst = arith.constant dense<0.000000e+00> : vector<128x128xf32>
    %2 = tpu.matmul %0, %1, %cst {dimension_numbers = #tpu.dot_dimension_numbers<[1], [0], [0], [1], [0, 0, 1, 1], [], []>} : vector<128x128xbf16>, vector<128x128xbf16>, vector<128x128xf32> -> vector<128x128xf32>
    %c0_3 = arith.constant 0 : index
    %c0_4 = arith.constant 0 : index
    %3 = vector.load %arg3[%c0_3, %c0_4] : memref<1x128xf32, #tpu.memory_space<vmem>>, vector<1x128xf32>
    %4 = vector.broadcast %3 : vector<1x128xf32> to vector<128x128xf32>
    %5 = arith.addf %2, %4 : vector<128x128xf32>
    %6 = arith.truncf %5 : vector<128x128xf32> to vector<128x128xbf16>
    %c0_5 = arith.constant 0 : index
    %c0_6 = arith.constant 0 : index
    %7 = vector.load %arg4[%c0_5, %c0_6] : memref<128x128xbf16, #tpu.memory_space<vmem>>, vector<128x128xbf16>
    tpu.vector_store %arg4[%c0_5, %c0_6], %6 {strides = array<i32>} : memref<128x128xbf16, #tpu.memory_space<vmem>>, vector<128x128xbf16>,
    return
  }
  func.func @transform_0(%arg0: i32) -> (i32, i32) {
    %c0_i32 = arith.constant 0 : i32
    %c0_i32_0 = arith.constant 0 : i32
    return %arg0, %c0_i32 : i32, i32
  }
  func.func @transform_1(%arg0: i32) -> (i32, i32) {
    %c0_i32 = arith.constant 0 : i32
    %c0_i32_0 = arith.constant 0 : i32
    %c0_i32_1 = arith.constant 0 : i32
    return %c0_i32, %c0_i32_0 : i32, i32
  }
  func.func @transform_2(%arg0: i32) -> (i32, i32) {
    %c0_i32 = arith.constant 0 : i32
    %c0_i32_0 = arith.constant 0 : i32
    %c0_i32_1 = arith.constant 0 : i32
    return %c0_i32, %c0_i32_0 : i32, i32
  }
  func.func @transform_3(%arg0: i32) -> (i32, i32) {
    %c0_i32 = arith.constant 0 : i32
    %c0_i32_0 = arith.constant 0 : i32
    return %arg0, %c0_i32 : i32, i32
  }
}

module attributes {stable_mosaic.version = 11 : i64} {
  func.func @gcn_aggregate_kernel(%arg0: i32, %arg1: i32, %arg2: memref<128x128xbf16, #tpu.memory_space<vmem>>, %arg3: memref<128x128xbf16, #tpu.memory_space<vmem>>, %arg4: memref<128x128xbf16, #tpu.memory_space<vmem>>, %arg5: memref<128x1xf32, #tpu.memory_space<vmem>>, %arg6: memref<128x128xbf16, #tpu.memory_space<vmem>>, %arg7: memref<128x128xf32, #tpu.memory_space<vmem>>) attributes {dimension_semantics = [#tpu.dimension_semantics<parallel>, #tpu.dimension_semantics<arbitrary>], iteration_bounds = array<i64: 1, 1>, scalar_prefetch = 0 : i64, scratch_operands = 1 : i64, tpu.core_type = #tpu.core_type<tc>, window_params = [{transform_indices = @transform_0, window_bounds = array<i64: 128, 128>}, {pipeline_mode = #tpu.pipeline_mode<synchronous>, transform_indices = @transform_1, window_bounds = array<i64: 128, 128>}, {transform_indices = @transform_2, window_bounds = array<i64: 128, 128>}, {transform_indices = @transform_3, window_bounds = array<i64: 128, 1>}, {transform_indices = @transform_4, window_bounds = array<i64: 128, 128>}]} {
    %c0_i32 = arith.constant 0 : i32
    %0 = arith.cmpi eq, %arg1, %c0_i32 : i32
    %1 = arith.extui %0 : i1 to i32
    %c0_i32_0 = arith.constant 0 : i32
    %2 = arith.cmpi ne, %1, %c0_i32_0 : i32
    scf.if %2 {
      %cst_9 = arith.constant 0.000000e+00 : f32
      %15 = vector.broadcast %cst_9 : f32 to vector<128x128xf32>
      %c0_10 = arith.constant 0 : index
      %c0_11 = arith.constant 0 : index
      %16 = vector.load %arg7[%c0_10, %c0_11] : memref<128x128xf32, #tpu.memory_space<vmem>>, vector<128x128xf32>
      tpu.vector_store %arg7[%c0_10, %c0_11], %15 {strides = array<i32>} : memref<128x128xf32, #tpu.memory_space<vmem>>, vector<128x128xf32>,
    } else {
    }
    %c128_i32 = arith.constant 128 : i32
    %3 = arith.muli %arg1, %c128_i32 : i32
    %4 = tpu.assume_multiple %3, 128 : i32
    %5 = arith.index_cast %4 : i32 to index
    %c0 = arith.constant 0 : index
    %6 = vector.load %arg3[%5, %c0] : memref<128x128xbf16, #tpu.memory_space<vmem>>, vector<128x128xbf16>
    %c0_1 = arith.constant 0 : index
    %c0_2 = arith.constant 0 : index
    %7 = vector.load %arg7[%c0_1, %c0_2] : memref<128x128xf32, #tpu.memory_space<vmem>>, vector<128x128xf32>
    %c0_3 = arith.constant 0 : index
    %c0_4 = arith.constant 0 : index
    %8 = vector.load %arg2[%c0_3, %c0_4] : memref<128x128xbf16, #tpu.memory_space<vmem>>, vector<128x128xbf16>
    %cst = arith.constant dense<0.000000e+00> : vector<128x128xf32>
    %9 = tpu.matmul %8, %6, %cst {dimension_numbers = #tpu.dot_dimension_numbers<[1], [0], [0], [1], [0, 0, 1, 1], [], []>} : vector<128x128xbf16>, vector<128x128xbf16>, vector<128x128xf32> -> vector<128x128xf32>
    %10 = arith.addf %7, %9 : vector<128x128xf32>
    %c0_5 = arith.constant 0 : index
    %c0_6 = arith.constant 0 : index
    %11 = vector.load %arg7[%c0_5, %c0_6] : memref<128x128xf32, #tpu.memory_space<vmem>>, vector<128x128xf32>
    tpu.vector_store %arg7[%c0_5, %c0_6], %10 {strides = array<i32>} : memref<128x128xf32, #tpu.memory_space<vmem>>, vector<128x128xf32>,
    %c0_i32_7 = arith.constant 0 : i32
    %12 = arith.cmpi eq, %arg1, %c0_i32_7 : i32
    %13 = arith.extui %12 : i1 to i32
    %c0_i32_8 = arith.constant 0 : i32
    %14 = arith.cmpi ne, %13, %c0_i32_8 : i32
    scf.if %14 {
      %c0_9 = arith.constant 0 : index
      %c0_10 = arith.constant 0 : index
      %15 = vector.load %arg7[%c0_9, %c0_10] : memref<128x128xf32, #tpu.memory_space<vmem>>, vector<128x128xf32>
      %c0_11 = arith.constant 0 : index
      %c0_12 = arith.constant 0 : index
      %16 = vector.load %arg5[%c0_11, %c0_12] : memref<128x1xf32, #tpu.memory_space<vmem>>, vector<128x1xf32>
      %17 = vector.broadcast %16 : vector<128x1xf32> to vector<128x128xf32>
      %18 = arith.mulf %15, %17 : vector<128x128xf32>
      %cst_13 = arith.constant 0.000000e+00 : f32
      %19 = vector.broadcast %cst_13 : f32 to vector<128x128xf32>
      %20 = arith.maximumf %18, %19 : vector<128x128xf32>
      %c0_14 = arith.constant 0 : index
      %c0_15 = arith.constant 0 : index
      %21 = vector.load %arg4[%c0_14, %c0_15] : memref<128x128xbf16, #tpu.memory_space<vmem>>, vector<128x128xbf16>
      %22 = arith.extf %21 : vector<128x128xbf16> to vector<128x128xf32>
      %23 = arith.addf %20, %22 : vector<128x128xf32>
      %24 = arith.truncf %23 : vector<128x128xf32> to vector<128x128xbf16>
      %c0_16 = arith.constant 0 : index
      %c0_17 = arith.constant 0 : index
      %25 = vector.load %arg6[%c0_16, %c0_17] : memref<128x128xbf16, #tpu.memory_space<vmem>>, vector<128x128xbf16>
      tpu.vector_store %arg6[%c0_16, %c0_17], %24 {strides = array<i32>} : memref<128x128xbf16, #tpu.memory_space<vmem>>, vector<128x128xbf16>,
    } else {
    }
    return
  }
  func.func @transform_0(%arg0: i32, %arg1: i32) -> (i32, i32) {
    %c0_i32 = arith.constant 0 : i32
    return %arg0, %arg1 : i32, i32
  }
  func.func @transform_1(%arg0: i32, %arg1: i32) -> (i32, i32) {
    %c0_i32 = arith.constant 0 : i32
    %c0_i32_0 = arith.constant 0 : i32
    %c0_i32_1 = arith.constant 0 : i32
    return %c0_i32, %c0_i32_0 : i32, i32
  }
  func.func @transform_2(%arg0: i32, %arg1: i32) -> (i32, i32) {
    %c0_i32 = arith.constant 0 : i32
    %c0_i32_0 = arith.constant 0 : i32
    return %arg0, %c0_i32 : i32, i32
  }
  func.func @transform_3(%arg0: i32, %arg1: i32) -> (i32, i32) {
    %c0_i32 = arith.constant 0 : i32
    %c0_i32_0 = arith.constant 0 : i32
    return %arg0, %c0_i32 : i32, i32
  }
  func.func @transform_4(%arg0: i32, %arg1: i32) -> (i32, i32) {
    %c0_i32 = arith.constant 0 : i32
    %c0_i32_0 = arith.constant 0 : i32
    return %arg0, %c0_i32 : i32, i32
  }
}

module attributes {stable_mosaic.version = 11 : i64} {
  func.func @gcn_aggregate_decode_kernel(%arg0: i32, %arg1: i32, %arg2: memref<128x128xbf16, #tpu.memory_space<vmem>>, %arg3: memref<128x128xbf16, #tpu.memory_space<vmem>>, %arg4: memref<128x128xbf16, #tpu.memory_space<vmem>>, %arg5: memref<128x1xf32, #tpu.memory_space<vmem>>, %arg6: memref<128x128xbf16, #tpu.memory_space<vmem>>, %arg7: memref<1x128xf32, #tpu.memory_space<vmem>>, %arg8: memref<128x128xbf16, #tpu.memory_space<vmem>>, %arg9: memref<1x128xf32, #tpu.memory_space<vmem>>, %arg10: memref<128x128xf32, #tpu.memory_space<vmem>>, %arg11: memref<128x128xf32, #tpu.memory_space<vmem>>, %arg12: memref<128x128xf32, #tpu.memory_space<vmem>>) attributes {dimension_semantics = [#tpu.dimension_semantics<parallel>, #tpu.dimension_semantics<arbitrary>], iteration_bounds = array<i64: 1, 1>, scalar_prefetch = 0 : i64, scratch_operands = 1 : i64, tpu.core_type = #tpu.core_type<tc>, window_params = [{transform_indices = @transform_0, window_bounds = array<i64: 128, 128>}, {pipeline_mode = #tpu.pipeline_mode<synchronous>, transform_indices = @transform_1, window_bounds = array<i64: 128, 128>}, {transform_indices = @transform_2, window_bounds = array<i64: 128, 128>}, {transform_indices = @transform_3, window_bounds = array<i64: 128, 1>}, {pipeline_mode = #tpu.pipeline_mode<synchronous>, transform_indices = @transform_4, window_bounds = array<i64: 128, 128>}, {pipeline_mode = #tpu.pipeline_mode<synchronous>, transform_indices = @transform_5, window_bounds = array<i64: 1, 128>}, {pipeline_mode = #tpu.pipeline_mode<synchronous>, transform_indices = @transform_6, window_bounds = array<i64: 128, 128>}, {pipeline_mode = #tpu.pipeline_mode<synchronous>, transform_indices = @transform_7, window_bounds = array<i64: 1, 128>}, {transform_indices = @transform_8, window_bounds = array<i64: 128, 128>}, {transform_indices = @transform_9, window_bounds = array<i64: 128, 128>}]} {
    %c0_i32 = arith.constant 0 : i32
    %0 = arith.cmpi eq, %arg1, %c0_i32 : i32
    %1 = arith.extui %0 : i1 to i32
    %c0_i32_0 = arith.constant 0 : i32
    %2 = arith.cmpi ne, %1, %c0_i32_0 : i32
    scf.if %2 {
      %cst_9 = arith.constant 0.000000e+00 : f32
      %15 = vector.broadcast %cst_9 : f32 to vector<128x128xf32>
      %c0_10 = arith.constant 0 : index
      %c0_11 = arith.constant 0 : index
      %16 = vector.load %arg12[%c0_10, %c0_11] : memref<128x128xf32, #tpu.memory_space<vmem>>, vector<128x128xf32>
      tpu.vector_store %arg12[%c0_10, %c0_11], %15 {strides = array<i32>} : memref<128x128xf32, #tpu.memory_space<vmem>>, vector<128x128xf32>,
    } else {
    }
    %c128_i32 = arith.constant 128 : i32
    %3 = arith.muli %arg1, %c128_i32 : i32
    %4 = tpu.assume_multiple %3, 128 : i32
    %5 = arith.index_cast %4 : i32 to index
    %c0 = arith.constant 0 : index
    %6 = vector.load %arg3[%5, %c0] : memref<128x128xbf16, #tpu.memory_space<vmem>>, vector<128x128xbf16>
    %c0_1 = arith.constant 0 : index
    %c0_2 = arith.constant 0 : index
    %7 = vector.load %arg12[%c0_1, %c0_2] : memref<128x128xf32, #tpu.memory_space<vmem>>, vector<128x128xf32>
    %c0_3 = arith.constant 0 : index
    %c0_4 = arith.constant 0 : index
    %8 = vector.load %arg2[%c0_3, %c0_4] : memref<128x128xbf16, #tpu.memory_space<vmem>>, vector<128x128xbf16>
    %cst = arith.constant dense<0.000000e+00> : vector<128x128xf32>
    %9 = tpu.matmul %8, %6, %cst {dimension_numbers = #tpu.dot_dimension_numbers<[1], [0], [0], [1], [0, 0, 1, 1], [], []>} : vector<128x128xbf16>, vector<128x128xbf16>, vector<128x128xf32> -> vector<128x128xf32>
    %10 = arith.addf %7, %9 : vector<128x128xf32>
    %c0_5 = arith.constant 0 : index
    %c0_6 = arith.constant 0 : index
    %11 = vector.load %arg12[%c0_5, %c0_6] : memref<128x128xf32, #tpu.memory_space<vmem>>, vector<128x128xf32>
    tpu.vector_store %arg12[%c0_5, %c0_6], %10 {strides = array<i32>} : memref<128x128xf32, #tpu.memory_space<vmem>>, vector<128x128xf32>,
    %c0_i32_7 = arith.constant 0 : i32
    %12 = arith.cmpi eq, %arg1, %c0_i32_7 : i32
    %13 = arith.extui %12 : i1 to i32
    %c0_i32_8 = arith.constant 0 : i32
    %14 = arith.cmpi ne, %13, %c0_i32_8 : i32
    scf.if %14 {
      %c0_9 = arith.constant 0 : index
      %c0_10 = arith.constant 0 : index
      %15 = vector.load %arg12[%c0_9, %c0_10] : memref<128x128xf32, #tpu.memory_space<vmem>>, vector<128x128xf32>
      %c0_11 = arith.constant 0 : index
      %c0_12 = arith.constant 0 : index
      %16 = vector.load %arg5[%c0_11, %c0_12] : memref<128x1xf32, #tpu.memory_space<vmem>>, vector<128x1xf32>
      %17 = vector.broadcast %16 : vector<128x1xf32> to vector<128x128xf32>
      %18 = arith.mulf %15, %17 : vector<128x128xf32>
      %cst_13 = arith.constant 0.000000e+00 : f32
      %19 = vector.broadcast %cst_13 : f32 to vector<128x128xf32>
      %20 = arith.maximumf %18, %19 : vector<128x128xf32>
      %c0_14 = arith.constant 0 : index
      %c0_15 = arith.constant 0 : index
      %21 = vector.load %arg4[%c0_14, %c0_15] : memref<128x128xbf16, #tpu.memory_space<vmem>>, vector<128x128xbf16>
      %22 = arith.extf %21 : vector<128x128xbf16> to vector<128x128xf32>
      %23 = arith.addf %20, %22 : vector<128x128xf32>
      %c0_16 = arith.constant 0 : index
      %c0_17 = arith.constant 0 : index
      %24 = vector.load %arg11[%c0_16, %c0_17] : memref<128x128xf32, #tpu.memory_space<vmem>>, vector<128x128xf32>
      tpu.vector_store %arg11[%c0_16, %c0_17], %23 {strides = array<i32>} : memref<128x128xf32, #tpu.memory_space<vmem>>, vector<128x128xf32>,
      %25 = arith.truncf %23 : vector<128x128xf32> to vector<128x128xbf16>
      %c0_18 = arith.constant 0 : index
      %c0_19 = arith.constant 0 : index
      %26 = vector.load %arg6[%c0_18, %c0_19] : memref<128x128xbf16, #tpu.memory_space<vmem>>, vector<128x128xbf16>
      %cst_20 = arith.constant dense<0.000000e+00> : vector<128x128xf32>
      %27 = tpu.matmul %25, %26, %cst_20 {dimension_numbers = #tpu.dot_dimension_numbers<[1], [0], [0], [1], [0, 0, 1, 1], [], []>} : vector<128x128xbf16>, vector<128x128xbf16>, vector<128x128xf32> -> vector<128x128xf32>
      %c0_21 = arith.constant 0 : index
      %c0_22 = arith.constant 0 : index
      %28 = vector.load %arg7[%c0_21, %c0_22] : memref<1x128xf32, #tpu.memory_space<vmem>>, vector<1x128xf32>
      %29 = vector.broadcast %28 : vector<1x128xf32> to vector<128x128xf32>
      %30 = arith.addf %27, %29 : vector<128x128xf32>
      %cst_23 = arith.constant 0.000000e+00 : f32
      %31 = vector.broadcast %cst_23 : f32 to vector<128x128xf32>
      %32 = arith.maximumf %30, %31 : vector<128x128xf32>
      %33 = arith.truncf %32 : vector<128x128xf32> to vector<128x128xbf16>
      %c0_24 = arith.constant 0 : index
      %c0_25 = arith.constant 0 : index
      %34 = vector.load %arg8[%c0_24, %c0_25] : memref<128x128xbf16, #tpu.memory_space<vmem>>, vector<128x128xbf16>
      %cst_26 = arith.constant dense<0.000000e+00> : vector<128x128xf32>
      %35 = tpu.matmul %33, %34, %cst_26 {dimension_numbers = #tpu.dot_dimension_numbers<[1], [0], [0], [1], [0, 0, 1, 1], [], []>} : vector<128x128xbf16>, vector<128x128xbf16>, vector<128x128xf32> -> vector<128x128xf32>
      %c0_27 = arith.constant 0 : index
      %c0_28 = arith.constant 0 : index
      %36 = vector.load %arg9[%c0_27, %c0_28] : memref<1x128xf32, #tpu.memory_space<vmem>>, vector<1x128xf32>
      %37 = vector.broadcast %36 : vector<1x128xf32> to vector<128x128xf32>
      %38 = arith.addf %35, %37 : vector<128x128xf32>
      %c0_29 = arith.constant 0 : index
      %c0_30 = arith.constant 0 : index
      %39 = vector.load %arg10[%c0_29, %c0_30] : memref<128x128xf32, #tpu.memory_space<vmem>>, vector<128x128xf32>
      tpu.vector_store %arg10[%c0_29, %c0_30], %38 {strides = array<i32>} : memref<128x128xf32, #tpu.memory_space<vmem>>, vector<128x128xf32>,
    } else {
    }
    return
  }
  func.func @transform_0(%arg0: i32, %arg1: i32) -> (i32, i32) {
    %c0_i32 = arith.constant 0 : i32
    return %arg0, %arg1 : i32, i32
  }
  func.func @transform_1(%arg0: i32, %arg1: i32) -> (i32, i32) {
    %c0_i32 = arith.constant 0 : i32
    %c0_i32_0 = arith.constant 0 : i32
    %c0_i32_1 = arith.constant 0 : i32
    return %c0_i32, %c0_i32_0 : i32, i32
  }
  func.func @transform_2(%arg0: i32, %arg1: i32) -> (i32, i32) {
    %c0_i32 = arith.constant 0 : i32
    %c0_i32_0 = arith.constant 0 : i32
    return %arg0, %c0_i32 : i32, i32
  }
  func.func @transform_3(%arg0: i32, %arg1: i32) -> (i32, i32) {
    %c0_i32 = arith.constant 0 : i32
    %c0_i32_0 = arith.constant 0 : i32
    return %arg0, %c0_i32 : i32, i32
  }
  func.func @transform_4(%arg0: i32, %arg1: i32) -> (i32, i32) {
    %c0_i32 = arith.constant 0 : i32
    %c0_i32_0 = arith.constant 0 : i32
    %c0_i32_1 = arith.constant 0 : i32
    return %c0_i32, %c0_i32_0 : i32, i32
  }
  func.func @transform_5(%arg0: i32, %arg1: i32) -> (i32, i32) {
    %c0_i32 = arith.constant 0 : i32
    %c0_i32_0 = arith.constant 0 : i32
    %c0_i32_1 = arith.constant 0 : i32
    return %c0_i32, %c0_i32_0 : i32, i32
  }
  func.func @transform_6(%arg0: i32, %arg1: i32) -> (i32, i32) {
    %c0_i32 = arith.constant 0 : i32
    %c0_i32_0 = arith.constant 0 : i32
    %c0_i32_1 = arith.constant 0 : i32
    return %c0_i32, %c0_i32_0 : i32, i32
  }
  func.func @transform_7(%arg0: i32, %arg1: i32) -> (i32, i32) {
    %c0_i32 = arith.constant 0 : i32
    %c0_i32_0 = arith.constant 0 : i32
    %c0_i32_1 = arith.constant 0 : i32
    return %c0_i32, %c0_i32_0 : i32, i32
  }
  func.func @transform_8(%arg0: i32, %arg1: i32) -> (i32, i32) {
    %c0_i32 = arith.constant 0 : i32
    %c0_i32_0 = arith.constant 0 : i32
    return %arg0, %c0_i32 : i32, i32
  }
  func.func @transform_9(%arg0: i32, %arg1: i32) -> (i32, i32) {
    %c0_i32 = arith.constant 0 : i32
    %c0_i32_0 = arith.constant 0 : i32
    return %arg0, %c0_i32 : i32, i32
  }
}

</mosaic_0001>

<llo_original>
// kernel: graph_autoencoder_apply.4
$region0: #{graph_autoencoder_apply.4}
  #allocation0 [shape = 'u32[]', space=smem, size = 0x4, offset = 0x4, fixed_abs, tag = 'smem constant byte address 0x4 - core index']
  #allocation1 [shape = 'u32[144,128]{1,0:T(1,128)}', space=vmem, size = 0x12000, scoped, tag = 'internal scratch']
  %s0 = inlined_call_operand.vmem [shape: bf16[128,128], index: 0, kind: input, shape index: {}]
  %s1 = inlined_call_operand.vmem [shape: bf16[128,128], index: 1, kind: input, shape index: {}]
  %s2 = inlined_call_operand.vmem [shape: f32[1,128], index: 2, kind: input, shape index: {}]
  %s3 = inlined_call_operand.vmem [shape: bf16[128,128], index: 3, kind: output, shape index: {}]
  %s4 = sld [smem:[#allocation0]]
  $region22: #{graph_autoencoder_apply.4} parent=0
    _
  %s6 = ssub.s32 1, %s4
  %s7 = scalar_select 0, %s6, %s4
  // Predicated region
  $region2: #{graph_autoencoder_apply.4} parent=0 // pred_check
    _
  $region3: #{graph_autoencoder_apply.4} parent=0 // pred_check_branch
    %9 = sbr.rel (0) target = $region5
  $region4: #{graph_autoencoder_apply.4} parent=0 // pred_region
    _
  $region5: #{graph_autoencoder_apply.4} parent=0 // pred_fallthru
    _
  // Predicated region
  $region6: #{graph_autoencoder_apply.4} parent=0 // pred_check
    _
  $region7: #{graph_autoencoder_apply.4} parent=0 // pred_check_branch
    %11 = sbr.rel (0) target = $region9
  $region8: #{graph_autoencoder_apply.4} parent=0 // pred_region
    _
  $region9: #{graph_autoencoder_apply.4} parent=0 // pred_fallthru
    _
  // Predicated region
  $region10: #{graph_autoencoder_apply.4} parent=0 // pred_check
    _
  $region11: #{graph_autoencoder_apply.4} parent=0 // pred_check_branch
    %13 = sbr.rel (0) target = $region13
  $region12: #{graph_autoencoder_apply.4} parent=0 // pred_region
    _
  $region13: #{graph_autoencoder_apply.4} parent=0 // pred_fallthru
    _
  %v15 = vld [vmem:[%s0] sm:$0xf]
  %v16 = vld [vmem:[%s0 + $0x4] sm:$0xf]
  %v17 = vld [vmem:[%s0 + $0x8] sm:$0xf]
  %v18 = vld [vmem:[%s0 + $0xc] sm:$0xf]
  %v19 = vld [vmem:[%s0 + $0x10] sm:$0xf]
  %v20 = vld [vmem:[%s0 + $0x14] sm:$0xf]
  %v21 = vld [vmem:[%s0 + $0x18] sm:$0xf]
  %v22 = vld [vmem:[%s0 + $0x1c] sm:$0xf]
  %v23 = vld [vmem:[%s0 + $0x20] sm:$0xf]
  %v24 = vld [vmem:[%s0 + $0x24] sm:$0xf]
  %v25 = vld [vmem:[%s0 + $0x28] sm:$0xf]
  %v26 = vld [vmem:[%s0 + $0x2c] sm:$0xf]
  %v27 = vld [vmem:[%s0 + $0x30] sm:$0xf]
  %v28 = vld [vmem:[%s0 + $0x34] sm:$0xf]
  %v29 = vld [vmem:[%s0 + $0x38] sm:$0xf]
  %v30 = vld [vmem:[%s0 + $0x3c] sm:$0xf]
  %v31 = vld [vmem:[%s1] sm:$0xf]
  %v32 = vld [vmem:[%s1 + $0x4] sm:$0xf]
  %v33 = vld [vmem:[%s1 + $0x8] sm:$0xf]
  %v34 = vld [vmem:[%s1 + $0xc] sm:$0xf]
  %v35 = vld [vmem:[%s1 + $0x10] sm:$0xf]
  %v36 = vld [vmem:[%s1 + $0x14] sm:$0xf]
  %v37 = vld [vmem:[%s1 + $0x18] sm:$0xf]
  %v38 = vld [vmem:[%s1 + $0x1c] sm:$0xf]
  %v39 = vld [vmem:[%s1 + $0x20] sm:$0xf]
  %v40 = vld [vmem:[%s1 + $0x24] sm:$0xf]
  %v41 = vld [vmem:[%s1 + $0x28] sm:$0xf]
  %v42 = vld [vmem:[%s1 + $0x2c] sm:$0xf]
  %v43 = vld [vmem:[%s1 + $0x30] sm:$0xf]
  %v44 = vld [vmem:[%s1 + $0x34] sm:$0xf]
  %v45 = vld [vmem:[%s1 + $0x38] sm:$0xf]
  %v46 = vld [vmem:[%s1 + $0x3c] sm:$0xf]
  %v47 = vld [vmem:[%s2] sm:$0x1]
  %v49 = vlaneseq
  %v50 = vshrl.u32 %v49, 7
  %v51 = vsub.s32 0, %v50
  %v52 = vrot.slane %v47, %v51
  %v70 = vunpack.c.l.b16 %v15
  %v71 = vunpack.c.l.b16 %v16
  %v72 = vunpack.c.l.b16 %v17
  %v73 = vunpack.c.l.b16 %v18
  %v74 = vunpack.c.l.b16 %v19
  %v75 = vunpack.c.l.b16 %v20
  %v76 = vunpack.c.l.b16 %v21
  %v77 = vunpack.c.l.b16 %v22
  %v78 = vunpack.c.l.b16 %v23
  %v79 = vunpack.c.l.b16 %v24
  %v80 = vunpack.c.l.b16 %v25
  %v81 = vunpack.c.l.b16 %v26
  %v82 = vunpack.c.l.b16 %v27
  %v83 = vunpack.c.l.b16 %v28
  %v84 = vunpack.c.l.b16 %v29
  %v85 = vunpack.c.l.b16 %v30
  %v86 = vpack.c.b16 %v71, %v70
  %v87 = vpack.c.b16 %v73, %v72
  %v88 = vpack.c.b16 %v75, %v74
  %v89 = vpack.c.b16 %v77, %v76
  %v90 = vpack.c.b16 %v79, %v78
  %v91 = vpack.c.b16 %v81, %v80
  %v92 = vpack.c.b16 %v83, %v82
  %v93 = vpack.c.b16 %v85, %v84
  %v118 = vunpack.c.l.b16 %v31
  %v119 = vunpack.c.l.b16 %v32
  %v120 = vunpack.c.l.b16 %v33
  %v121 = vunpack.c.l.b16 %v34
  %v122 = vunpack.c.l.b16 %v35
  %v123 = vunpack.c.l.b16 %v36
  %v124 = vunpack.c.l.b16 %v37
  %v125 = vunpack.c.l.b16 %v38
  %v126 = vunpack.c.l.b16 %v39
  %v127 = vunpack.c.l.b16 %v40
  %v128 = vunpack.c.l.b16 %v41
  %v129 = vunpack.c.l.b16 %v42
  %v130 = vunpack.c.l.b16 %v43
  %v131 = vunpack.c.l.b16 %v44
  %v132 = vunpack.c.l.b16 %v45
  %v133 = vunpack.c.l.b16 %v46
  %v134 = vpack.c.b16 %v119, %v118
  %v135 = vpack.c.b16 %v121, %v120
  %v136 = vpack.c.b16 %v123, %v122
  %v137 = vpack.c.b16 %v125, %v124
  %v138 = vpack.c.b16 %v127, %v126
  %v139 = vpack.c.b16 %v129, %v128
  %v140 = vpack.c.b16 %v131, %v130
  %v141 = vpack.c.b16 %v133, %v132
  %150 = vmatprep.subr.bf16.mxu0 0
  %151 = vmatpush1.bf16.msra.mxu0 %v141
  %152 = vmatprep.subr.bf16.mxu0 0
  %153 = vmatpush1.bf16.msra.mxu0 %v140
  %154 = vmatprep.subr.bf16.mxu0 0
  %155 = vmatpush1.bf16.msra.mxu0 %v139
  %156 = vmatprep.subr.bf16.mxu0 0
  %157 = vmatpush1.bf16.msra.mxu0 %v138
  %158 = vmatprep.subr.bf16.mxu0 0
  %159 = vmatpush1.bf16.msra.mxu0 %v137
  %160 = vmatprep.subr.bf16.mxu0 0
  %161 = vmatpush1.bf16.msra.mxu0 %v136
  %162 = vmatprep.subr.bf16.mxu0 0
  %163 = vmatpush1.bf16.msra.mxu0 %v135
  %164 = vmatprep.subr.bf16.mxu0 0
  %165 = vmatpush1.bf16.msra.mxu0 %v134
  %166 = vmatprep.subr.bf16.mxu0 0
  %167 = vmatpush2.bf16.msra.mxu0 0
  %168 = vmatprep.subr.bf16.mxu0 0
  %169 = vmatpush2.bf16.msra.mxu0 0
  %170 = vmatprep.subr.bf16.mxu0 0
  %171 = vmatpush2.bf16.msra.mxu0 0
  %172 = vmatprep.subr.bf16.mxu0 0
  %173 = vmatpush2.bf16.msra.mxu0 0
  %174 = vmatprep.subr.bf16.mxu0 0
  %175 = vmatpush2.bf16.msra.mxu0 0
  %176 = vmatprep.subr.bf16.mxu0 0
  %177 = vmatpush2.bf16.msra.mxu0 0
  %178 = vmatprep.subr.bf16.mxu0 0
  %179 = vmatpush2.bf16.msra.mxu0 0
  %180 = vmatprep.subr.bf16.mxu0 0
  %181 = vmatpush2.bf16.msra.mxu0 0
  %182 = vmatprep.mubr.bf16.mxu0 0
  %183 = vmatmul.mubr.bf16.gmra.mxu0 %v86
  %v184 = vpop.f32.mrf.mxu0
  %v185 = vadd.f32 %v52, %v184
  %v186 = vpop.f32.mrf.mxu0
  %v187 = vpop.f32.mrf.mxu0
  %v188 = vadd.f32 %v52, %v187
  %v189 = vpop.f32.mrf.mxu0
  %190 = vmatprep.mubr.bf16.mxu0 0
  %191 = vmatmul.mubr.bf16.gmra.mxu0 %v87
  %v192 = vpop.f32.mrf.mxu0
  %v193 = vadd.f32 %v52, %v192
  %v194 = vpop.f32.mrf.mxu0
  %v195 = vpop.f32.mrf.mxu0
  %v196 = vadd.f32 %v52, %v195
  %v197 = vpop.f32.mrf.mxu0
  %198 = vmatprep.mubr.bf16.mxu0 0
  %199 = vmatmul.mubr.bf16.gmra.mxu0 %v88
  %v200 = vpop.f32.mrf.mxu0
  %v201 = vadd.f32 %v52, %v200
  %v202 = vpop.f32.mrf.mxu0
  %v203 = vpop.f32.mrf.mxu0
  %v204 = vadd.f32 %v52, %v203
  %v205 = vpop.f32.mrf.mxu0
  %206 = vmatprep.mubr.bf16.mxu0 0
  %207 = vmatmul.mubr.bf16.gmra.mxu0 %v89
  %v208 = vpop.f32.mrf.mxu0
  %v209 = vadd.f32 %v52, %v208
  %v210 = vpop.f32.mrf.mxu0
  %v211 = vpop.f32.mrf.mxu0
  %v212 = vadd.f32 %v52, %v211
  %v213 = vpop.f32.mrf.mxu0
  %214 = vmatprep.mubr.bf16.mxu0 0
  %215 = vmatmul.mubr.bf16.gmra.mxu0 %v90
  %v216 = vpop.f32.mrf.mxu0
  %v217 = vadd.f32 %v52, %v216
  %v218 = vpop.f32.mrf.mxu0
  %v219 = vpop.f32.mrf.mxu0
  %v220 = vadd.f32 %v52, %v219
  %v221 = vpop.f32.mrf.mxu0
  %222 = vmatprep.mubr.bf16.mxu0 0
  %223 = vmatmul.mubr.bf16.gmra.mxu0 %v91
  %v224 = vpop.f32.mrf.mxu0
  %v225 = vadd.f32 %v52, %v224
  %v226 = vpop.f32.mrf.mxu0
  %v227 = vpop.f32.mrf.mxu0
  %v228 = vadd.f32 %v52, %v227
  %v229 = vpop.f32.mrf.mxu0
  %230 = vmatprep.mubr.bf16.mxu0 0
  %231 = vmatmul.mubr.bf16.gmra.mxu0 %v92
  %v232 = vpop.f32.mrf.mxu0
  %v233 = vadd.f32 %v52, %v232
  %v234 = vpop.f32.mrf.mxu0
  %v235 = vpop.f32.mrf.mxu0
  %v236 = vadd.f32 %v52, %v235
  %v237 = vpop.f32.mrf.mxu0
  %238 = vmatprep.mubr.bf16.mxu0 0
  %239 = vmatmul.mubr.bf16.gmra.mxu0 %v93
  %v240 = vpop.f32.mrf.mxu0
  %v241 = vadd.f32 %v52, %v240
  %v242 = vpop.f32.mrf.mxu0
  %v243 = vpop.f32.mrf.mxu0
  %v244 = vadd.f32 %v52, %v243
  %v245 = vpop.f32.mrf.mxu0
  %246 = vdwg.mxu0
  %v247 = vpack.c.bf16 %v188, %v185
  %v248 = vpack.c.bf16 %v196, %v193
  %v249 = vpack.c.bf16 %v204, %v201
  %v250 = vpack.c.bf16 %v212, %v209
  %v251 = vpack.c.bf16 %v220, %v217
  %v252 = vpack.c.bf16 %v228, %v225
  %v253 = vpack.c.bf16 %v236, %v233
  %v254 = vpack.c.bf16 %v244, %v241
  %v263 = vunpack.c.l.b16 %v247
  %v264 = vunpack.c.h.b16 %v247
  %v265 = vunpack.c.l.b16 %v248
  %v266 = vunpack.c.h.b16 %v248
  %v267 = vunpack.c.l.b16 %v249
  %v268 = vunpack.c.h.b16 %v249
  %v269 = vunpack.c.l.b16 %v250
  %v270 = vunpack.c.h.b16 %v250
  %v271 = vunpack.c.l.b16 %v251
  %v272 = vunpack.c.h.b16 %v251
  %v273 = vunpack.c.l.b16 %v252
  %v274 = vunpack.c.h.b16 %v252
  %v275 = vunpack.c.l.b16 %v253
  %v276 = vunpack.c.h.b16 %v253
  %v277 = vunpack.c.l.b16 %v254
  %v278 = vunpack.c.h.b16 %v254
  %v279 = vpack.c.b16 %v263, %v263
  %v280 = vpack.c.b16 %v264, %v264
  %v281 = vpack.c.b16 %v265, %v265
  %v282 = vpack.c.b16 %v266, %v266
  %v283 = vpack.c.b16 %v267, %v267
  %v284 = vpack.c.b16 %v268, %v268
  %v285 = vpack.c.b16 %v269, %v269
  %v286 = vpack.c.b16 %v270, %v270
  %v287 = vpack.c.b16 %v271, %v271
  %v288 = vpack.c.b16 %v272, %v272
  %v289 = vpack.c.b16 %v273, %v273
  %v290 = vpack.c.b16 %v274, %v274
  %v291 = vpack.c.b16 %v275, %v275
  %v292 = vpack.c.b16 %v276, %v276
  %v293 = vpack.c.b16 %v277, %v277
  %v294 = vpack.c.b16 %v278, %v278
  %311 = vst [vmem:[%s3] sm:$0xf] %v279
  %312 = vst [vmem:[%s3 + $0x4] sm:$0xf] %v280
  %313 = vst [vmem:[%s3 + $0x8] sm:$0xf] %v281
  %314 = vst [vmem:[%s3 + $0xc] sm:$0xf] %v282
  %315 = vst [vmem:[%s3 + $0x10] sm:$0xf] %v283
  %316 = vst [vmem:[%s3 + $0x14] sm:$0xf] %v284
  %317 = vst [vmem:[%s3 + $0x18] sm:$0xf] %v285
  %318 = vst [vmem:[%s3 + $0x1c] sm:$0xf] %v286
  %319 = vst [vmem:[%s3 + $0x20] sm:$0xf] %v287
  %320 = vst [vmem:[%s3 + $0x24] sm:$0xf] %v288
  %321 = vst [vmem:[%s3 + $0x28] sm:$0xf] %v289
  %322 = vst [vmem:[%s3 + $0x2c] sm:$0xf] %v290
  %323 = vst [vmem:[%s3 + $0x30] sm:$0xf] %v291
  %324 = vst [vmem:[%s3 + $0x34] sm:$0xf] %v292
  %325 = vst [vmem:[%s3 + $0x38] sm:$0xf] %v293
  %326 = vst [vmem:[%s3 + $0x3c] sm:$0xf] %v294
  // Predicated region
  $region14: #{graph_autoencoder_apply.4} parent=0 // pred_check
    _
  $region15: #{graph_autoencoder_apply.4} parent=0 // pred_check_branch
    %328 = sbr.rel (0) target = $region17
  $region16: #{graph_autoencoder_apply.4} parent=0 // pred_region
    _
  $region17: #{graph_autoencoder_apply.4} parent=0 // pred_fallthru
    _
  // Predicated region
  $region18: #{graph_autoencoder_apply.4} parent=0 // pred_check
    _
  $region19: #{graph_autoencoder_apply.4} parent=0 // pred_check_branch
    %330 = sbr.rel (0) target = $region21
  $region20: #{graph_autoencoder_apply.4} parent=0 // pred_region
    _
  $region21: #{graph_autoencoder_apply.4} parent=0 // pred_fallthru
    _

// kernel: graph_autoencoder_apply.5
$region0: #{graph_autoencoder_apply.5}
  #allocation0 [shape = 'u32[]', space=smem, size = 0x4, offset = 0x4, fixed_abs, tag = 'smem constant byte address 0x4 - core index']
  #allocation1 [shape = 'u32[144,128]{1,0:T(1,128)}', space=vmem, size = 0x12000, scoped, tag = 'internal scratch']
  #allocation2 [shape = 'f32[128,128]{1,0:T(8,128)}', space=vmem, size = 0x10000, scoped, tag = 'scratch operand']
  %s0 = inlined_call_operand.vmem [shape: bf16[128,128], index: 0, kind: input, shape index: {}]
  %s1 = inlined_call_operand.vmem [shape: bf16[128,128], index: 1, kind: input, shape index: {}, may-alias: {1,2}]
  %s2 = inlined_call_operand.vmem [shape: bf16[128,128], index: 2, kind: input, shape index: {}, may-alias: {1,2}]
  %s3 = inlined_call_operand.vmem [shape: f32[128,1], index: 3, kind: input, shape index: {}]
  %s4 = inlined_call_operand.vmem [shape: bf16[128,128], index: 4, kind: output, shape index: {}]
  %s5 = sld [smem:[#allocation0]]
  $region34: #{graph_autoencoder_apply.5} parent=0
    _
  %s7 = ssub.s32 1, %s5
  %s8 = scalar_select 0, %s7, %s5
  // Predicated region
  $region2: #{graph_autoencoder_apply.5} parent=0 // pred_check
    _
  $region3: #{graph_autoencoder_apply.5} parent=0 // pred_check_branch
    %10 = sbr.rel (0) target = $region5
  $region4: #{graph_autoencoder_apply.5} parent=0 // pred_region
    _
  $region5: #{graph_autoencoder_apply.5} parent=0 // pred_fallthru
    _
  // Predicated region
  $region6: #{graph_autoencoder_apply.5} parent=0 // pred_check
    _
  $region7: #{graph_autoencoder_apply.5} parent=0 // pred_check_branch
    %12 = sbr.rel (0) target = $region9
  $region8: #{graph_autoencoder_apply.5} parent=0 // pred_region
    _
  $region9: #{graph_autoencoder_apply.5} parent=0 // pred_fallthru
    _
  // Predicated region
  $region10: #{graph_autoencoder_apply.5} parent=0 // pred_check
    _
  $region11: #{graph_autoencoder_apply.5} parent=0 // pred_check_branch
    %14 = sbr.rel (0) target = $region13
  $region12: #{graph_autoencoder_apply.5} parent=0 // pred_region
    _
  $region13: #{graph_autoencoder_apply.5} parent=0 // pred_fallthru
    _
  // Predicated region
  $region14: #{graph_autoencoder_apply.5} parent=0 // pred_check
    _
  $region15: #{graph_autoencoder_apply.5} parent=0 // pred_check_branch
    %16 = sbr.rel (0) target = $region17
  $region16: #{graph_autoencoder_apply.5} parent=0 // pred_region
    _
  $region17: #{graph_autoencoder_apply.5} parent=0 // pred_fallthru
    _
  %p18 = scmp.eq.s32.totalorder 0, 0
  // Predicated region
  $region18: #{graph_autoencoder_apply.5} parent=0 // pred_check
    %p19 = pneg %p18
  $region19: #{graph_autoencoder_apply.5} parent=0 // pred_check_branch
    %21 = sbr.rel (%p19) target = $region21
  $region20: #{graph_autoencoder_apply.5} parent=0 // pred_region
    %22 = vst [vmem:[#allocation2] sm:$0xff] 0.0
    %23 = vst [vmem:[#allocation2 + $0x8] sm:$0xff] 0.0
    %24 = vst [vmem:[#allocation2 + $0x10] sm:$0xff] 0.0
    %25 = vst [vmem:[#allocation2 + $0x18] sm:$0xff] 0.0
    %26 = vst [vmem:[#allocation2 + $0x20] sm:$0xff] 0.0
    %27 = vst [vmem:[#allocation2 + $0x28] sm:$0xff] 0.0
    %28 = vst [vmem:[#allocation2 + $0x30] sm:$0xff] 0.0
    %29 = vst [vmem:[#allocation2 + $0x38] sm:$0xff] 0.0
    %30 = vst [vmem:[#allocation2 + $0x40] sm:$0xff] 0.0
    %31 = vst [vmem:[#allocation2 + $0x48] sm:$0xff] 0.0
    %32 = vst [vmem:[#allocation2 + $0x50] sm:$0xff] 0.0
    %33 = vst [vmem:[#allocation2 + $0x58] sm:$0xff] 0.0
    %34 = vst [vmem:[#allocation2 + $0x60] sm:$0xff] 0.0
    %35 = vst [vmem:[#allocation2 + $0x68] sm:$0xff] 0.0
    %36 = vst [vmem:[#allocation2 + $0x70] sm:$0xff] 0.0
    %37 = vst [vmem:[#allocation2 + $0x78] sm:$0xff] 0.0
  $region21: #{graph_autoencoder_apply.5} parent=0 // pred_fallthru
    _
  %s38 = smul.u32 0, 128
  %s39 = sshra.s32 %s38, 3
  %s40 = sand.u32 %s38, 7
  %s41 = smul.addr %s39, 4
  %s42 = scalar_lea.vmem %s1, %s41
  %v43 = vld [vmem:[%s42] sm:$0xf]
  %v44 = vld [vmem:[%s42 + $0x4] sm:$0xf]
  %v45 = vld [vmem:[%s42 + $0x8] sm:$0xf]
  %v46 = vld [vmem:[%s42 + $0xc] sm:$0xf]
  %v47 = vld [vmem:[%s42 + $0x10] sm:$0xf]
  %v48 = vld [vmem:[%s42 + $0x14] sm:$0xf]
  %v49 = vld [vmem:[%s42 + $0x18] sm:$0xf]
  %v50 = vld [vmem:[%s42 + $0x1c] sm:$0xf]
  %v51 = vld [vmem:[%s42 + $0x20] sm:$0xf]
  %v52 = vld [vmem:[%s42 + $0x24] sm:$0xf]
  %v53 = vld [vmem:[%s42 + $0x28] sm:$0xf]
  %v54 = vld [vmem:[%s42 + $0x2c] sm:$0xf]
  %v55 = vld [vmem:[%s42 + $0x30] sm:$0xf]
  %v56 = vld [vmem:[%s42 + $0x34] sm:$0xf]
  %v57 = vld [vmem:[%s42 + $0x38] sm:$0xf]
  %v58 = vld [vmem:[%s42 + $0x3c] sm:$0xf]
  %v59 = vld [vmem:[#allocation2] sm:$0xff]
  %v60 = vld [vmem:[#allocation2 + $0x8] sm:$0xff]
  %v61 = vld [vmem:[#allocation2 + $0x10] sm:$0xff]
  %v62 = vld [vmem:[#allocation2 + $0x18] sm:$0xff]
  %v63 = vld [vmem:[#allocation2 + $0x20] sm:$0xff]
  %v64 = vld [vmem:[#allocation2 + $0x28] sm:$0xff]
  %v65 = vld [vmem:[#allocation2 + $0x30] sm:$0xff]
  %v66 = vld [vmem:[#allocation2 + $0x38] sm:$0xff]
  %v67 = vld [vmem:[#allocation2 + $0x40] sm:$0xff]
  %v68 = vld [vmem:[#allocation2 + $0x48] sm:$0xff]
  %v69 = vld [vmem:[#allocation2 + $0x50] sm:$0xff]
  %v70 = vld [vmem:[#allocation2 + $0x58] sm:$0xff]
  %v71 = vld [vmem:[#allocation2 + $0x60] sm:$0xff]
  %v72 = vld [vmem:[#allocation2 + $0x68] sm:$0xff]
  %v73 = vld [vmem:[#allocation2 + $0x70] sm:$0xff]
  %v74 = vld [vmem:[#allocation2 + $0x78] sm:$0xff]
  %v75 = vld [vmem:[%s0] sm:$0xf]
  %v76 = vld [vmem:[%s0 + $0x4] sm:$0xf]
  %v77 = vld [vmem:[%s0 + $0x8] sm:$0xf]
  %v78 = vld [vmem:[%s0 + $0xc] sm:$0xf]
  %v79 = vld [vmem:[%s0 + $0x10] sm:$0xf]
  %v80 = vld [vmem:[%s0 + $0x14] sm:$0xf]
  %v81 = vld [vmem:[%s0 + $0x18] sm:$0xf]
  %v82 = vld [vmem:[%s0 + $0x1c] sm:$0xf]
  %v83 = vld [vmem:[%s0 + $0x20] sm:$0xf]
  %v84 = vld [vmem:[%s0 + $0x24] sm:$0xf]
  %v85 = vld [vmem:[%s0 + $0x28] sm:$0xf]
  %v86 = vld [vmem:[%s0 + $0x2c] sm:$0xf]
  %v87 = vld [vmem:[%s0 + $0x30] sm:$0xf]
  %v88 = vld [vmem:[%s0 + $0x34] sm:$0xf]
  %v89 = vld [vmem:[%s0 + $0x38] sm:$0xf]
  %v90 = vld [vmem:[%s0 + $0x3c] sm:$0xf]
  %v107 = vunpack.c.l.b16 %v75
  %v108 = vunpack.c.l.b16 %v76
  %v109 = vunpack.c.l.b16 %v77
  %v110 = vunpack.c.l.b16 %v78
  %v111 = vunpack.c.l.b16 %v79
  %v112 = vunpack.c.l.b16 %v80
  %v113 = vunpack.c.l.b16 %v81
  %v114 = vunpack.c.l.b16 %v82
  %v115 = vunpack.c.l.b16 %v83
  %v116 = vunpack.c.l.b16 %v84
  %v117 = vunpack.c.l.b16 %v85
  %v118 = vunpack.c.l.b16 %v86
  %v119 = vunpack.c.l.b16 %v87
  %v120 = vunpack.c.l.b16 %v88
  %v121 = vunpack.c.l.b16 %v89
  %v122 = vunpack.c.l.b16 %v90
  %v123 = vpack.c.b16 %v108, %v107
  %v124 = vpack.c.b16 %v110, %v109
  %v125 = vpack.c.b16 %v112, %v111
  %v126 = vpack.c.b16 %v114, %v113
  %v127 = vpack.c.b16 %v116, %v115
  %v128 = vpack.c.b16 %v118, %v117
  %v129 = vpack.c.b16 %v120, %v119
  %v130 = vpack.c.b16 %v122, %v121
  %v155 = vunpack.c.l.b16 %v43
  %v156 = vunpack.c.l.b16 %v44
  %v157 = vunpack.c.l.b16 %v45
  %v158 = vunpack.c.l.b16 %v46
  %v159 = vunpack.c.l.b16 %v47
  %v160 = vunpack.c.l.b16 %v48
  %v161 = vunpack.c.l.b16 %v49
  %v162 = vunpack.c.l.b16 %v50
  %v163 = vunpack.c.l.b16 %v51
  %v164 = vunpack.c.l.b16 %v52
  %v165 = vunpack.c.l.b16 %v53
  %v166 = vunpack.c.l.b16 %v54
  %v167 = vunpack.c.l.b16 %v55
  %v168 = vunpack.c.l.b16 %v56
  %v169 = vunpack.c.l.b16 %v57
  %v170 = vunpack.c.l.b16 %v58
  %v171 = vpack.c.b16 %v156, %v155
  %v172 = vpack.c.b16 %v158, %v157
  %v173 = vpack.c.b16 %v160, %v159
  %v174 = vpack.c.b16 %v162, %v161
  %v175 = vpack.c.b16 %v164, %v163
  %v176 = vpack.c.b16 %v166, %v165
  %v177 = vpack.c.b16 %v168, %v167
  %v178 = vpack.c.b16 %v170, %v169
  %187 = vmatprep.subr.bf16.mxu0 0
  %188 = vmatpush1.bf16.msra.mxu0 %v178
  %189 = vmatprep.subr.bf16.mxu0 0
  %190 = vmatpush1.bf16.msra.mxu0 %v177
  %191 = vmatprep.subr.bf16.mxu0 0
  %192 = vmatpush1.bf16.msra.mxu0 %v176
  %193 = vmatprep.subr.bf16.mxu0 0
  %194 = vmatpush1.bf16.msra.mxu0 %v175
  %195 = vmatprep.subr.bf16.mxu0 0
  %196 = vmatpush1.bf16.msra.mxu0 %v174
  %197 = vmatprep.subr.bf16.mxu0 0
  %198 = vmatpush1.bf16.msra.mxu0 %v173
  %199 = vmatprep.subr.bf16.mxu0 0
  %200 = vmatpush1.bf16.msra.mxu0 %v172
  %201 = vmatprep.subr.bf16.mxu0 0
  %202 = vmatpush1.bf16.msra.mxu0 %v171
  %203 = vmatprep.subr.bf16.mxu0 0
  %204 = vmatpush2.bf16.msra.mxu0 0
  %205 = vmatprep.subr.bf16.mxu0 0
  %206 = vmatpush2.bf16.msra.mxu0 0
  %207 = vmatprep.subr.bf16.mxu0 0
  %208 = vmatpush2.bf16.msra.mxu0 0
  %209 = vmatprep.subr.bf16.mxu0 0
  %210 = vmatpush2.bf16.msra.mxu0 0
  %211 = vmatprep.subr.bf16.mxu0 0
  %212 = vmatpush2.bf16.msra.mxu0 0
  %213 = vmatprep.subr.bf16.mxu0 0
  %214 = vmatpush2.bf16.msra.mxu0 0
  %215 = vmatprep.subr.bf16.mxu0 0
  %216 = vmatpush2.bf16.msra.mxu0 0
  %217 = vmatprep.subr.bf16.mxu0 0
  %218 = vmatpush2.bf16.msra.mxu0 0
  %219 = vmatprep.mubr.bf16.mxu0 0
  %220 = vmatmul.mubr.bf16.gmra.mxu0 %v123
  %v221 = vpop.f32.mrf.mxu0
  %v222 = vadd.f32 0.0, %v221
  %v223 = vpop.f32.mrf.mxu0
  %v224 = vpop.f32.mrf.mxu0
  %v225 = vadd.f32 0.0, %v224
  %v226 = vpop.f32.mrf.mxu0
  %227 = vmatprep.mubr.bf16.mxu0 0
  %228 = vmatmul.mubr.bf16.gmra.mxu0 %v124
  %v229 = vpop.f32.mrf.mxu0
  %v230 = vadd.f32 0.0, %v229
  %v231 = vpop.f32.mrf.mxu0
  %v232 = vpop.f32.mrf.mxu0
  %v233 = vadd.f32 0.0, %v232
  %v234 = vpop.f32.mrf.mxu0
  %235 = vmatprep.mubr.bf16.mxu0 0
  %236 = vmatmul.mubr.bf16.gmra.mxu0 %v125
  %v237 = vpop.f32.mrf.mxu0
  %v238 = vadd.f32 0.0, %v237
  %v239 = vpop.f32.mrf.mxu0
  %v240 = vpop.f32.mrf.mxu0
  %v241 = vadd.f32 0.0, %v240
  %v242 = vpop.f32.mrf.mxu0
  %243 = vmatprep.mubr.bf16.mxu0 0
  %244 = vmatmul.mubr.bf16.gmra.mxu0 %v126
  %v245 = vpop.f32.mrf.mxu0
  %v246 = vadd.f32 0.0, %v245
  %v247 = vpop.f32.mrf.mxu0
  %v248 = vpop.f32.mrf.mxu0
  %v249 = vadd.f32 0.0, %v248
  %v250 = vpop.f32.mrf.mxu0
  %251 = vmatprep.mubr.bf16.mxu0 0
  %252 = vmatmul.mubr.bf16.gmra.mxu0 %v127
  %v253 = vpop.f32.mrf.mxu0
  %v254 = vadd.f32 0.0, %v253
  %v255 = vpop.f32.mrf.mxu0
  %v256 = vpop.f32.mrf.mxu0
  %v257 = vadd.f32 0.0, %v256
  %v258 = vpop.f32.mrf.mxu0
  %259 = vmatprep.mubr.bf16.mxu0 0
  %260 = vmatmul.mubr.bf16.gmra.mxu0 %v128
  %v261 = vpop.f32.mrf.mxu0
  %v262 = vadd.f32 0.0, %v261
  %v263 = vpop.f32.mrf.mxu0
  %v264 = vpop.f32.mrf.mxu0
  %v265 = vadd.f32 0.0, %v264
  %v266 = vpop.f32.mrf.mxu0
  %267 = vmatprep.mubr.bf16.mxu0 0
  %268 = vmatmul.mubr.bf16.gmra.mxu0 %v129
  %v269 = vpop.f32.mrf.mxu0
  %v270 = vadd.f32 0.0, %v269
  %v271 = vpop.f32.mrf.mxu0
  %v272 = vpop.f32.mrf.mxu0
  %v273 = vadd.f32 0.0, %v272
  %v274 = vpop.f32.mrf.mxu0
  %275 = vmatprep.mubr.bf16.mxu0 0
  %276 = vmatmul.mubr.bf16.gmra.mxu0 %v130
  %v277 = vpop.f32.mrf.mxu0
  %v278 = vadd.f32 0.0, %v277
  %v279 = vpop.f32.mrf.mxu0
  %v280 = vpop.f32.mrf.mxu0
  %v281 = vadd.f32 0.0, %v280
  %v282 = vpop.f32.mrf.mxu0
  %283 = vdwg.mxu0
  %v284 = vadd.f32 %v59, %v222
  %v285 = vadd.f32 %v60, %v225
  %v286 = vadd.f32 %v61, %v230
  %v287 = vadd.f32 %v62, %v233
  %v288 = vadd.f32 %v63, %v238
  %v289 = vadd.f32 %v64, %v241
  %v290 = vadd.f32 %v65, %v246
  %v291 = vadd.f32 %v66, %v249
  %v292 = vadd.f32 %v67, %v254
  %v293 = vadd.f32 %v68, %v257
  %v294 = vadd.f32 %v69, %v262
  %v295 = vadd.f32 %v70, %v265
  %v296 = vadd.f32 %v71, %v270
  %v297 = vadd.f32 %v72, %v273
  %v298 = vadd.f32 %v73, %v278
  %v299 = vadd.f32 %v74, %v281
  %300 = vst [vmem:[#allocation2] sm:$0xff] %v284
  %301 = vst [vmem:[#allocation2 + $0x8] sm:$0xff] %v285
  %302 = vst [vmem:[#allocation2 + $0x10] sm:$0xff] %v286
  %303 = vst [vmem:[#allocation2 + $0x18] sm:$0xff] %v287
  %304 = vst [vmem:[#allocation2 + $0x20] sm:$0xff] %v288
  %305 = vst [vmem:[#allocation2 + $0x28] sm:$0xff] %v289
  %306 = vst [vmem:[#allocation2 + $0x30] sm:$0xff] %v290
  %307 = vst [vmem:[#allocation2 + $0x38] sm:$0xff] %v291
  %308 = vst [vmem:[#allocation2 + $0x40] sm:$0xff] %v292
  %309 = vst [vmem:[#allocation2 + $0x48] sm:$0xff] %v293
  %310 = vst [vmem:[#allocation2 + $0x50] sm:$0xff] %v294
  %311 = vst [vmem:[#allocation2 + $0x58] sm:$0xff] %v295
  %312 = vst [vmem:[#allocation2 + $0x60] sm:$0xff] %v296
  %313 = vst [vmem:[#allocation2 + $0x68] sm:$0xff] %v297
  %314 = vst [vmem:[#allocation2 + $0x70] sm:$0xff] %v298
  %315 = vst [vmem:[#allocation2 + $0x78] sm:$0xff] %v299
  // Predicated region
  $region22: #{graph_autoencoder_apply.5} parent=0 // pred_check
    %p316 = pneg %p18
  $region23: #{graph_autoencoder_apply.5} parent=0 // pred_check_branch
    %318 = sbr.rel (%p316) target = $region25
  $region24: #{graph_autoencoder_apply.5} parent=0 // pred_region
    %v319 = vld [vmem:[#allocation2] sm:$0xff]
    %v320 = vld [vmem:[#allocation2 + $0x8] sm:$0xff]
    %v321 = vld [vmem:[#allocation2 + $0x10] sm:$0xff]
    %v322 = vld [vmem:[#allocation2 + $0x18] sm:$0xff]
    %v323 = vld [vmem:[#allocation2 + $0x20] sm:$0xff]
    %v324 = vld [vmem:[#allocation2 + $0x28] sm:$0xff]
    %v325 = vld [vmem:[#allocation2 + $0x30] sm:$0xff]
    %v326 = vld [vmem:[#allocation2 + $0x38] sm:$0xff]
    %v327 = vld [vmem:[#allocation2 + $0x40] sm:$0xff]
    %v328 = vld [vmem:[#allocation2 + $0x48] sm:$0xff]
    %v329 = vld [vmem:[#allocation2 + $0x50] sm:$0xff]
    %v330 = vld [vmem:[#allocation2 + $0x58] sm:$0xff]
    %v331 = vld [vmem:[#allocation2 + $0x60] sm:$0xff]
    %v332 = vld [vmem:[#allocation2 + $0x68] sm:$0xff]
    %v333 = vld [vmem:[#allocation2 + $0x70] sm:$0xff]
    %v334 = vld [vmem:[#allocation2 + $0x78] sm:$0xff]
    %v335 = vld [vmem:[%s3] sm:$0xff]
    %v336 = vld [vmem:[%s3 + $0x8] sm:$0xff]
    %v337 = vld [vmem:[%s3 + $0x10] sm:$0xff]
    %v338 = vld [vmem:[%s3 + $0x18] sm:$0xff]
    %v339 = vld [vmem:[%s3 + $0x20] sm:$0xff]
    %v340 = vld [vmem:[%s3 + $0x28] sm:$0xff]
    %v341 = vld [vmem:[%s3 + $0x30] sm:$0xff]
    %v342 = vld [vmem:[%s3 + $0x38] sm:$0xff]
    %v343 = vld [vmem:[%s3 + $0x40] sm:$0xff]
    %v344 = vld [vmem:[%s3 + $0x48] sm:$0xff]
    %v345 = vld [vmem:[%s3 + $0x50] sm:$0xff]
    %v346 = vld [vmem:[%s3 + $0x58] sm:$0xff]
    %v347 = vld [vmem:[%s3 + $0x60] sm:$0xff]
    %v348 = vld [vmem:[%s3 + $0x68] sm:$0xff]
    %v349 = vld [vmem:[%s3 + $0x70] sm:$0xff]
    %v350 = vld [vmem:[%s3 + $0x78] sm:$0xff]
    %352 = vset.pattern.permute.xlu0 0
    %353 = vperm.xlu0 %352, %v335
    %v354 = vpop.permute.xlu0 %353
    %357 = vset.pattern.permute.xlu0 0
    %358 = vperm.xlu0 %357, %v336
    %v359 = vpop.permute.xlu0 %358
    %362 = vset.pattern.permute.xlu0 0
    %363 = vperm.xlu0 %362, %v337
    %v364 = vpop.permute.xlu0 %363
    %367 = vset.pattern.permute.xlu0 0
    %368 = vperm.xlu0 %367, %v338
    %v369 = vpop.permute.xlu0 %368
    %372 = vset.pattern.permute.xlu0 0
    %373 = vperm.xlu0 %372, %v339
    %v374 = vpop.permute.xlu0 %373
    %377 = vset.pattern.permute.xlu0 0
    %378 = vperm.xlu0 %377, %v340
    %v379 = vpop.permute.xlu0 %378
    %382 = vset.pattern.permute.xlu0 0
    %383 = vperm.xlu0 %382, %v341
    %v384 = vpop.permute.xlu0 %383
    %387 = vset.pattern.permute.xlu0 0
    %388 = vperm.xlu0 %387, %v342
    %v389 = vpop.permute.xlu0 %388
    %392 = vset.pattern.permute.xlu0 0
    %393 = vperm.xlu0 %392, %v343
    %v394 = vpop.permute.xlu0 %393
    %397 = vset.pattern.permute.xlu0 0
    %398 = vperm.xlu0 %397, %v344
    %v399 = vpop.permute.xlu0 %398
    %402 = vset.pattern.permute.xlu0 0
    %403 = vperm.xlu0 %402, %v345
    %v404 = vpop.permute.xlu0 %403
    %407 = vset.pattern.permute.xlu0 0
    %408 = vperm.xlu0 %407, %v346
    %v409 = vpop.permute.xlu0 %408
    %412 = vset.pattern.permute.xlu0 0
    %413 = vperm.xlu0 %412, %v347
    %v414 = vpop.permute.xlu0 %413
    %417 = vset.pattern.permute.xlu0 0
    %418 = vperm.xlu0 %417, %v348
    %v419 = vpop.permute.xlu0 %418
    %422 = vset.pattern.permute.xlu0 0
    %423 = vperm.xlu0 %422, %v349
    %v424 = vpop.permute.xlu0 %423
    %427 = vset.pattern.permute.xlu0 0
    %428 = vperm.xlu0 %427, %v350
    %v429 = vpop.permute.xlu0 %428
    %v431 = vmul.f32 %v319, %v354
    %v432 = vmul.f32 %v320, %v359
    %v433 = vmul.f32 %v321, %v364
    %v434 = vmul.f32 %v322, %v369
    %v435 = vmul.f32 %v323, %v374
    %v436 = vmul.f32 %v324, %v379
    %v437 = vmul.f32 %v325, %v384
    %v438 = vmul.f32 %v326, %v389
    %v439 = vmul.f32 %v327, %v394
    %v440 = vmul.f32 %v328, %v399
    %v441 = vmul.f32 %v329, %v404
    %v442 = vmul.f32 %v330, %v409
    %v443 = vmul.f32 %v331, %v414
    %v444 = vmul.f32 %v332, %v419
    %v445 = vmul.f32 %v333, %v424
    %v446 = vmul.f32 %v334, %v429
    %v447 = vmax.f32 %v431, 0.0
    %v448 = vmax.f32 %v432, 0.0
    %v449 = vmax.f32 %v433, 0.0
    %v450 = vmax.f32 %v434, 0.0
    %v451 = vmax.f32 %v435, 0.0
    %v452 = vmax.f32 %v436, 0.0
    %v453 = vmax.f32 %v437, 0.0
    %v454 = vmax.f32 %v438, 0.0
    %v455 = vmax.f32 %v439, 0.0
    %v456 = vmax.f32 %v440, 0.0
    %v457 = vmax.f32 %v441, 0.0
    %v458 = vmax.f32 %v442, 0.0
    %v459 = vmax.f32 %v443, 0.0
    %v460 = vmax.f32 %v444, 0.0
    %v461 = vmax.f32 %v445, 0.0
    %v462 = vmax.f32 %v446, 0.0
    %v463 = vld [vmem:[%s2] sm:$0xf]
    %v464 = vld [vmem:[%s2 + $0x4] sm:$0xf]
    %v465 = vld [vmem:[%s2 + $0x8] sm:$0xf]
    %v466 = vld [vmem:[%s2 + $0xc] sm:$0xf]
    %v467 = vld [vmem:[%s2 + $0x10] sm:$0xf]
    %v468 = vld [vmem:[%s2 + $0x14] sm:$0xf]
    %v469 = vld [vmem:[%s2 + $0x18] sm:$0xf]
    %v470 = vld [vmem:[%s2 + $0x1c] sm:$0xf]
    %v471 = vld [vmem:[%s2 + $0x20] sm:$0xf]
    %v472 = vld [vmem:[%s2 + $0x24] sm:$0xf]
    %v473 = vld [vmem:[%s2 + $0x28] sm:$0xf]
    %v474 = vld [vmem:[%s2 + $0x2c] sm:$0xf]
    %v475 = vld [vmem:[%s2 + $0x30] sm:$0xf]
    %v476 = vld [vmem:[%s2 + $0x34] sm:$0xf]
    %v477 = vld [vmem:[%s2 + $0x38] sm:$0xf]
    %v478 = vld [vmem:[%s2 + $0x3c] sm:$0xf]
    %v479 = vunpack.c.l.bf16 %v463
    %v480 = vunpack.c.l.bf16 %v464
    %v481 = vunpack.c.l.bf16 %v465
    %v482 = vunpack.c.l.bf16 %v466
    %v483 = vunpack.c.l.bf16 %v467
    %v484 = vunpack.c.l.bf16 %v468
    %v485 = vunpack.c.l.bf16 %v469
    %v486 = vunpack.c.l.bf16 %v470
    %v487 = vunpack.c.l.bf16 %v471
    %v488 = vunpack.c.l.bf16 %v472
    %v489 = vunpack.c.l.bf16 %v473
    %v490 = vunpack.c.l.bf16 %v474
    %v491 = vunpack.c.l.bf16 %v475
    %v492 = vunpack.c.l.bf16 %v476
    %v493 = vunpack.c.l.bf16 %v477
    %v494 = vunpack.c.l.bf16 %v478
    %v495 = vadd.f32 %v447, %v479
    %v496 = vadd.f32 %v448, %v480
    %v497 = vadd.f32 %v449, %v481
    %v498 = vadd.f32 %v450, %v482
    %v499 = vadd.f32 %v451, %v483
    %v500 = vadd.f32 %v452, %v484
    %v501 = vadd.f32 %v453, %v485
    %v502 = vadd.f32 %v454, %v486
    %v503 = vadd.f32 %v455, %v487
    %v504 = vadd.f32 %v456, %v488
    %v505 = vadd.f32 %v457, %v489
    %v506 = vadd.f32 %v458, %v490
    %v507 = vadd.f32 %v459, %v491
    %v508 = vadd.f32 %v460, %v492
    %v509 = vadd.f32 %v461, %v493
    %v510 = vadd.f32 %v462, %v494
    %v511 = vpack.c.bf16 %v496, %v495
    %v512 = vpack.c.bf16 %v498, %v497
    %v513 = vpack.c.bf16 %v500, %v499
    %v514 = vpack.c.bf16 %v502, %v501
    %v515 = vpack.c.bf16 %v504, %v503
    %v516 = vpack.c.bf16 %v506, %v505
    %v517 = vpack.c.bf16 %v508, %v507
    %v518 = vpack.c.bf16 %v510, %v509
    %v527 = vunpack.c.l.b16 %v511
    %v528 = vunpack.c.h.b16 %v511
    %v529 = vunpack.c.l.b16 %v512
    %v530 = vunpack.c.h.b16 %v512
    %v531 = vunpack.c.l.b16 %v513
    %v532 = vunpack.c.h.b16 %v513
    %v533 = vunpack.c.l.b16 %v514
    %v534 = vunpack.c.h.b16 %v514
    %v535 = vunpack.c.l.b16 %v515
    %v536 = vunpack.c.h.b16 %v515
    %v537 = vunpack.c.l.b16 %v516
    %v538 = vunpack.c.h.b16 %v516
    %v539 = vunpack.c.l.b16 %v517
    %v540 = vunpack.c.h.b16 %v517
    %v541 = vunpack.c.l.b16 %v518
    %v542 = vunpack.c.h.b16 %v518
    %v543 = vpack.c.b16 %v527, %v527
    %v544 = vpack.c.b16 %v528, %v528
    %v545 = vpack.c.b16 %v529, %v529
    %v546 = vpack.c.b16 %v530, %v530
    %v547 = vpack.c.b16 %v531, %v531
    %v548 = vpack.c.b16 %v532, %v532
    %v549 = vpack.c.b16 %v533, %v533
    %v550 = vpack.c.b16 %v534, %v534
    %v551 = vpack.c.b16 %v535, %v535
    %v552 = vpack.c.b16 %v536, %v536
    %v553 = vpack.c.b16 %v537, %v537
    %v554 = vpack.c.b16 %v538, %v538
    %v555 = vpack.c.b16 %v539, %v539
    %v556 = vpack.c.b16 %v540, %v540
    %v557 = vpack.c.b16 %v541, %v541
    %v558 = vpack.c.b16 %v542, %v542
    %575 = vst [vmem:[%s4] sm:$0xf] %v543
    %576 = vst [vmem:[%s4 + $0x4] sm:$0xf] %v544
    %577 = vst [vmem:[%s4 + $0x8] sm:$0xf] %v545
    %578 = vst [vmem:[%s4 + $0xc] sm:$0xf] %v546
    %579 = vst [vmem:[%s4 + $0x10] sm:$0xf] %v547
    %580 = vst [vmem:[%s4 + $0x14] sm:$0xf] %v548
    %581 = vst [vmem:[%s4 + $0x18] sm:$0xf] %v549
    %582 = vst [vmem:[%s4 + $0x1c] sm:$0xf] %v550
    %583 = vst [vmem:[%s4 + $0x20] sm:$0xf] %v551
    %584 = vst [vmem:[%s4 + $0x24] sm:$0xf] %v552
    %585 = vst [vmem:[%s4 + $0x28] sm:$0xf] %v553
    %586 = vst [vmem:[%s4 + $0x2c] sm:$0xf] %v554
    %587 = vst [vmem:[%s4 + $0x30] sm:$0xf] %v555
    %588 = vst [vmem:[%s4 + $0x34] sm:$0xf] %v556
    %589 = vst [vmem:[%s4 + $0x38] sm:$0xf] %v557
    %590 = vst [vmem:[%s4 + $0x3c] sm:$0xf] %v558
  $region25: #{graph_autoencoder_apply.5} parent=0 // pred_fallthru
    _
  // Predicated region
  $region26: #{graph_autoencoder_apply.5} parent=0 // pred_check
    _
  $region27: #{graph_autoencoder_apply.5} parent=0 // pred_check_branch
    %592 = sbr.rel (0) target = $region29
  $region28: #{graph_autoencoder_apply.5} parent=0 // pred_region
    _
  $region29: #{graph_autoencoder_apply.5} parent=0 // pred_fallthru
    _
  // Predicated region
  $region30: #{graph_autoencoder_apply.5} parent=0 // pred_check
    _
  $region31: #{graph_autoencoder_apply.5} parent=0 // pred_check_branch
    %594 = sbr.rel (0) target = $region33
  $region32: #{graph_autoencoder_apply.5} parent=0 // pred_region
    _
  $region33: #{graph_autoencoder_apply.5} parent=0 // pred_fallthru
    _

// kernel: graph_autoencoder_apply.7
$region0: #{graph_autoencoder_apply.7}
  #allocation0 [shape = 'u32[]', space=smem, size = 0x4, offset = 0x4, fixed_abs, tag = 'smem constant byte address 0x4 - core index']
  #allocation1 [shape = 'u32[144,128]{1,0:T(1,128)}', space=vmem, size = 0x12000, scoped, tag = 'internal scratch']
  #allocation2 [shape = 'f32[128,128]{1,0:T(8,128)}', space=vmem, size = 0x10000, scoped, tag = 'scratch operand']
  %s0 = inlined_call_operand.vmem [shape: bf16[128,128], index: 0, kind: input, shape index: {}]
  %s1 = inlined_call_operand.vmem [shape: bf16[128,128], index: 1, kind: input, shape index: {}, may-alias: {1,2}]
  %s2 = inlined_call_operand.vmem [shape: bf16[128,128], index: 2, kind: input, shape index: {}, may-alias: {1,2}]
  %s3 = inlined_call_operand.vmem [shape: f32[128,1], index: 3, kind: input, shape index: {}]
  %s4 = inlined_call_operand.vmem [shape: bf16[128,128], index: 4, kind: input, shape index: {}]
  %s5 = inlined_call_operand.vmem [shape: f32[1,128], index: 5, kind: input, shape index: {}]
  %s6 = inlined_call_operand.vmem [shape: bf16[128,128], index: 6, kind: input, shape index: {}]
  %s7 = inlined_call_operand.vmem [shape: f32[1,128], index: 7, kind: input, shape index: {}]
  %s8 = inlined_call_operand.vmem [shape: f32[128,128], index: 8, kind: output, shape index: {0}]
  %s9 = inlined_call_operand.vmem [shape: f32[128,128], index: 9, kind: output, shape index: {1}]
  %10 = xla_tuple %s8, %s9
  %s11 = sld [smem:[#allocation0]]
  $region58: #{graph_autoencoder_apply.7} parent=0
    _
  %s13 = ssub.s32 1, %s11
  %s14 = scalar_select 0, %s13, %s11
  // Predicated region
  $region2: #{graph_autoencoder_apply.7} parent=0 // pred_check
    _
  $region3: #{graph_autoencoder_apply.7} parent=0 // pred_check_branch
    %16 = sbr.rel (0) target = $region5
  $region4: #{graph_autoencoder_apply.7} parent=0 // pred_region
    _
  $region5: #{graph_autoencoder_apply.7} parent=0 // pred_fallthru
    _
  // Predicated region
  $region6: #{graph_autoencoder_apply.7} parent=0 // pred_check
    _
  $region7: #{graph_autoencoder_apply.7} parent=0 // pred_check_branch
    %18 = sbr.rel (0) target = $region9
  $region8: #{graph_autoencoder_apply.7} parent=0 // pred_region
    _
  $region9: #{graph_autoencoder_apply.7} parent=0 // pred_fallthru
    _
  // Predicated region
  $region10: #{graph_autoencoder_apply.7} parent=0 // pred_check
    _
  $region11: #{graph_autoencoder_apply.7} parent=0 // pred_check_branch
    %20 = sbr.rel (0) target = $region13
  $region12: #{graph_autoencoder_apply.7} parent=0 // pred_region
    _
  $region13: #{graph_autoencoder_apply.7} parent=0 // pred_fallthru
    _
  // Predicated region
  $region14: #{graph_autoencoder_apply.7} parent=0 // pred_check
    _
  $region15: #{graph_autoencoder_apply.7} parent=0 // pred_check_branch
    %22 = sbr.rel (0) target = $region17
  $region16: #{graph_autoencoder_apply.7} parent=0 // pred_region
    _
  $region17: #{graph_autoencoder_apply.7} parent=0 // pred_fallthru
    _
  // Predicated region
  $region18: #{graph_autoencoder_apply.7} parent=0 // pred_check
    _
  $region19: #{graph_autoencoder_apply.7} parent=0 // pred_check_branch
    %24 = sbr.rel (0) target = $region21
  $region20: #{graph_autoencoder_apply.7} parent=0 // pred_region
    _
  $region21: #{graph_autoencoder_apply.7} parent=0 // pred_fallthru
    _
  // Predicated region
  $region22: #{graph_autoencoder_apply.7} parent=0 // pred_check
    _
  $region23: #{graph_autoencoder_apply.7} parent=0 // pred_check_branch
    %26 = sbr.rel (0) target = $region25
  $region24: #{graph_autoencoder_apply.7} parent=0 // pred_region
    _
  $region25: #{graph_autoencoder_apply.7} parent=0 // pred_fallthru
    _
  // Predicated region
  $region26: #{graph_autoencoder_apply.7} parent=0 // pred_check
    _
  $region27: #{graph_autoencoder_apply.7} parent=0 // pred_check_branch
    %28 = sbr.rel (0) target = $region29
  $region28: #{graph_autoencoder_apply.7} parent=0 // pred_region
    _
  $region29: #{graph_autoencoder_apply.7} parent=0 // pred_fallthru
    _
  // Predicated region
  $region30: #{graph_autoencoder_apply.7} parent=0 // pred_check
    _
  $region31: #{graph_autoencoder_apply.7} parent=0 // pred_check_branch
    %30 = sbr.rel (0) target = $region33
  $region32: #{graph_autoencoder_apply.7} parent=0 // pred_region
    _
  $region33: #{graph_autoencoder_apply.7} parent=0 // pred_fallthru
    _
  %p32 = scmp.eq.s32.totalorder 0, 0
  // Predicated region
  $region34: #{graph_autoencoder_apply.7} parent=0 // pred_check
    %p33 = pneg %p32
  $region35: #{graph_autoencoder_apply.7} parent=0 // pred_check_branch
    %35 = sbr.rel (%p33) target = $region37
  $region36: #{graph_autoencoder_apply.7} parent=0 // pred_region
    %36 = vst [vmem:[#allocation2] sm:$0xff] 0.0
    %37 = vst [vmem:[#allocation2 + $0x8] sm:$0xff] 0.0
    %38 = vst [vmem:[#allocation2 + $0x10] sm:$0xff] 0.0
    %39 = vst [vmem:[#allocation2 + $0x18] sm:$0xff] 0.0
    %40 = vst [vmem:[#allocation2 + $0x20] sm:$0xff] 0.0
    %41 = vst [vmem:[#allocation2 + $0x28] sm:$0xff] 0.0
    %42 = vst [vmem:[#allocation2 + $0x30] sm:$0xff] 0.0
    %43 = vst [vmem:[#allocation2 + $0x38] sm:$0xff] 0.0
    %44 = vst [vmem:[#allocation2 + $0x40] sm:$0xff] 0.0
    %45 = vst [vmem:[#allocation2 + $0x48] sm:$0xff] 0.0
    %46 = vst [vmem:[#allocation2 + $0x50] sm:$0xff] 0.0
    %47 = vst [vmem:[#allocation2 + $0x58] sm:$0xff] 0.0
    %48 = vst [vmem:[#allocation2 + $0x60] sm:$0xff] 0.0
    %49 = vst [vmem:[#allocation2 + $0x68] sm:$0xff] 0.0
    %50 = vst [vmem:[#allocation2 + $0x70] sm:$0xff] 0.0
    %51 = vst [vmem:[#allocation2 + $0x78] sm:$0xff] 0.0
  $region37: #{graph_autoencoder_apply.7} parent=0 // pred_fallthru
    _
  %s52 = smul.u32 0, 128
  %s53 = sshra.s32 %s52, 3
  %s54 = sand.u32 %s52, 7
  %s55 = smul.addr %s53, 4
  %s56 = scalar_lea.vmem %s1, %s55
  %v57 = vld [vmem:[%s56] sm:$0xf]
  %v58 = vld [vmem:[%s56 + $0x4] sm:$0xf]
  %v59 = vld [vmem:[%s56 + $0x8] sm:$0xf]
  %v60 = vld [vmem:[%s56 + $0xc] sm:$0xf]
  %v61 = vld [vmem:[%s56 + $0x10] sm:$0xf]
  %v62 = vld [vmem:[%s56 + $0x14] sm:$0xf]
  %v63 = vld [vmem:[%s56 + $0x18] sm:$0xf]
  %v64 = vld [vmem:[%s56 + $0x1c] sm:$0xf]
  %v65 = vld [vmem:[%s56 + $0x20] sm:$0xf]
  %v66 = vld [vmem:[%s56 + $0x24] sm:$0xf]
  %v67 = vld [vmem:[%s56 + $0x28] sm:$0xf]
  %v68 = vld [vmem:[%s56 + $0x2c] sm:$0xf]
  %v69 = vld [vmem:[%s56 + $0x30] sm:$0xf]
  %v70 = vld [vmem:[%s56 + $0x34] sm:$0xf]
  %v71 = vld [vmem:[%s56 + $0x38] sm:$0xf]
  %v72 = vld [vmem:[%s56 + $0x3c] sm:$0xf]
  %v73 = vld [vmem:[#allocation2] sm:$0xff]
  %v74 = vld [vmem:[#allocation2 + $0x8] sm:$0xff]
  %v75 = vld [vmem:[#allocation2 + $0x10] sm:$0xff]
  %v76 = vld [vmem:[#allocation2 + $0x18] sm:$0xff]
  %v77 = vld [vmem:[#allocation2 + $0x20] sm:$0xff]
  %v78 = vld [vmem:[#allocation2 + $0x28] sm:$0xff]
  %v79 = vld [vmem:[#allocation2 + $0x30] sm:$0xff]
  %v80 = vld [vmem:[#allocation2 + $0x38] sm:$0xff]
  %v81 = vld [vmem:[#allocation2 + $0x40] sm:$0xff]
  %v82 = vld [vmem:[#allocation2 + $0x48] sm:$0xff]
  %v83 = vld [vmem:[#allocation2 + $0x50] sm:$0xff]
  %v84 = vld [vmem:[#allocation2 + $0x58] sm:$0xff]
  %v85 = vld [vmem:[#allocation2 + $0x60] sm:$0xff]
  %v86 = vld [vmem:[#allocation2 + $0x68] sm:$0xff]
  %v87 = vld [vmem:[#allocation2 + $0x70] sm:$0xff]
  %v88 = vld [vmem:[#allocation2 + $0x78] sm:$0xff]
  %v89 = vld [vmem:[%s0] sm:$0xf]
  %v90 = vld [vmem:[%s0 + $0x4] sm:$0xf]
  %v91 = vld [vmem:[%s0 + $0x8] sm:$0xf]
  %v92 = vld [vmem:[%s0 + $0xc] sm:$0xf]
  %v93 = vld [vmem:[%s0 + $0x10] sm:$0xf]
  %v94 = vld [vmem:[%s0 + $0x14] sm:$0xf]
  %v95 = vld [vmem:[%s0 + $0x18] sm:$0xf]
  %v96 = vld [vmem:[%s0 + $0x1c] sm:$0xf]
  %v97 = vld [vmem:[%s0 + $0x20] sm:$0xf]
  %v98 = vld [vmem:[%s0 + $0x24] sm:$0xf]
  %v99 = vld [vmem:[%s0 + $0x28] sm:$0xf]
  %v100 = vld [vmem:[%s0 + $0x2c] sm:$0xf]
  %v101 = vld [vmem:[%s0 + $0x30] sm:$0xf]
  %v102 = vld [vmem:[%s0 + $0x34] sm:$0xf]
  %v103 = vld [vmem:[%s0 + $0x38] sm:$0xf]
  %v104 = vld [vmem:[%s0 + $0x3c] sm:$0xf]
  %v121 = vunpack.c.l.b16 %v89
  %v122 = vunpack.c.l.b16 %v90
  %v123 = vunpack.c.l.b16 %v91
  %v124 = vunpack.c.l.b16 %v92
  %v125 = vunpack.c.l.b16 %v93
  %v126 = vunpack.c.l.b16 %v94
  %v127 = vunpack.c.l.b16 %v95
  %v128 = vunpack.c.l.b16 %v96
  %v129 = vunpack.c.l.b16 %v97
  %v130 = vunpack.c.l.b16 %v98
  %v131 = vunpack.c.l.b16 %v99
  %v132 = vunpack.c.l.b16 %v100
  %v133 = vunpack.c.l.b16 %v101
  %v134 = vunpack.c.l.b16 %v102
  %v135 = vunpack.c.l.b16 %v103
  %v136 = vunpack.c.l.b16 %v104
  %v137 = vpack.c.b16 %v122, %v121
  %v138 = vpack.c.b16 %v124, %v123
  %v139 = vpack.c.b16 %v126, %v125
  %v140 = vpack.c.b16 %v128, %v127
  %v141 = vpack.c.b16 %v130, %v129
  %v142 = vpack.c.b16 %v132, %v131
  %v143 = vpack.c.b16 %v134, %v133
  %v144 = vpack.c.b16 %v136, %v135
  %v169 = vunpack.c.l.b16 %v57
  %v170 = vunpack.c.l.b16 %v58
  %v171 = vunpack.c.l.b16 %v59
  %v172 = vunpack.c.l.b16 %v60
  %v173 = vunpack.c.l.b16 %v61
  %v174 = vunpack.c.l.b16 %v62
  %v175 = vunpack.c.l.b16 %v63
  %v176 = vunpack.c.l.b16 %v64
  %v177 = vunpack.c.l.b16 %v65
  %v178 = vunpack.c.l.b16 %v66
  %v179 = vunpack.c.l.b16 %v67
  %v180 = vunpack.c.l.b16 %v68
  %v181 = vunpack.c.l.b16 %v69
  %v182 = vunpack.c.l.b16 %v70
  %v183 = vunpack.c.l.b16 %v71
  %v184 = vunpack.c.l.b16 %v72
  %v185 = vpack.c.b16 %v170, %v169
  %v186 = vpack.c.b16 %v172, %v171
  %v187 = vpack.c.b16 %v174, %v173
  %v188 = vpack.c.b16 %v176, %v175
  %v189 = vpack.c.b16 %v178, %v177
  %v190 = vpack.c.b16 %v180, %v179
  %v191 = vpack.c.b16 %v182, %v181
  %v192 = vpack.c.b16 %v184, %v183
  %201 = vmatprep.subr.bf16.mxu0 0
  %202 = vmatpush1.bf16.msra.mxu0 %v192
  %203 = vmatprep.subr.bf16.mxu0 0
  %204 = vmatpush1.bf16.msra.mxu0 %v191
  %205 = vmatprep.subr.bf16.mxu0 0
  %206 = vmatpush1.bf16.msra.mxu0 %v190
  %207 = vmatprep.subr.bf16.mxu0 0
  %208 = vmatpush1.bf16.msra.mxu0 %v189
  %209 = vmatprep.subr.bf16.mxu0 0
  %210 = vmatpush1.bf16.msra.mxu0 %v188
  %211 = vmatprep.subr.bf16.mxu0 0
  %212 = vmatpush1.bf16.msra.mxu0 %v187
  %213 = vmatprep.subr.bf16.mxu0 0
  %214 = vmatpush1.bf16.msra.mxu0 %v186
  %215 = vmatprep.subr.bf16.mxu0 0
  %216 = vmatpush1.bf16.msra.mxu0 %v185
  %217 = vmatprep.subr.bf16.mxu0 0
  %218 = vmatpush2.bf16.msra.mxu0 0
  %219 = vmatprep.subr.bf16.mxu0 0
  %220 = vmatpush2.bf16.msra.mxu0 0
  %221 = vmatprep.subr.bf16.mxu0 0
  %222 = vmatpush2.bf16.msra.mxu0 0
  %223 = vmatprep.subr.bf16.mxu0 0
  %224 = vmatpush2.bf16.msra.mxu0 0
  %225 = vmatprep.subr.bf16.mxu0 0
  %226 = vmatpush2.bf16.msra.mxu0 0
  %227 = vmatprep.subr.bf16.mxu0 0
  %228 = vmatpush2.bf16.msra.mxu0 0
  %229 = vmatprep.subr.bf16.mxu0 0
  %230 = vmatpush2.bf16.msra.mxu0 0
  %231 = vmatprep.subr.bf16.mxu0 0
  %232 = vmatpush2.bf16.msra.mxu0 0
  %233 = vmatprep.mubr.bf16.mxu0 0
  %234 = vmatmul.mubr.bf16.gmra.mxu0 %v137
  %v235 = vpop.f32.mrf.mxu0
  %v236 = vadd.f32 0.0, %v235
  %v237 = vpop.f32.mrf.mxu0
  %v238 = vpop.f32.mrf.mxu0
  %v239 = vadd.f32 0.0, %v238
  %v240 = vpop.f32.mrf.mxu0
  %241 = vmatprep.mubr.bf16.mxu0 0
  %242 = vmatmul.mubr.bf16.gmra.mxu0 %v138
  %v243 = vpop.f32.mrf.mxu0
  %v244 = vadd.f32 0.0, %v243
  %v245 = vpop.f32.mrf.mxu0
  %v246 = vpop.f32.mrf.mxu0
  %v247 = vadd.f32 0.0, %v246
  %v248 = vpop.f32.mrf.mxu0
  %249 = vmatprep.mubr.bf16.mxu0 0
  %250 = vmatmul.mubr.bf16.gmra.mxu0 %v139
  %v251 = vpop.f32.mrf.mxu0
  %v252 = vadd.f32 0.0, %v251
  %v253 = vpop.f32.mrf.mxu0
  %v254 = vpop.f32.mrf.mxu0
  %v255 = vadd.f32 0.0, %v254
  %v256 = vpop.f32.mrf.mxu0
  %257 = vmatprep.mubr.bf16.mxu0 0
  %258 = vmatmul.mubr.bf16.gmra.mxu0 %v140
  %v259 = vpop.f32.mrf.mxu0
  %v260 = vadd.f32 0.0, %v259
  %v261 = vpop.f32.mrf.mxu0
  %v262 = vpop.f32.mrf.mxu0
  %v263 = vadd.f32 0.0, %v262
  %v264 = vpop.f32.mrf.mxu0
  %265 = vmatprep.mubr.bf16.mxu0 0
  %266 = vmatmul.mubr.bf16.gmra.mxu0 %v141
  %v267 = vpop.f32.mrf.mxu0
  %v268 = vadd.f32 0.0, %v267
  %v269 = vpop.f32.mrf.mxu0
  %v270 = vpop.f32.mrf.mxu0
  %v271 = vadd.f32 0.0, %v270
  %v272 = vpop.f32.mrf.mxu0
  %273 = vmatprep.mubr.bf16.mxu0 0
  %274 = vmatmul.mubr.bf16.gmra.mxu0 %v142
  %v275 = vpop.f32.mrf.mxu0
  %v276 = vadd.f32 0.0, %v275
  %v277 = vpop.f32.mrf.mxu0
  %v278 = vpop.f32.mrf.mxu0
  %v279 = vadd.f32 0.0, %v278
  %v280 = vpop.f32.mrf.mxu0
  %281 = vmatprep.mubr.bf16.mxu0 0
  %282 = vmatmul.mubr.bf16.gmra.mxu0 %v143
  %v283 = vpop.f32.mrf.mxu0
  %v284 = vadd.f32 0.0, %v283
  %v285 = vpop.f32.mrf.mxu0
  %v286 = vpop.f32.mrf.mxu0
  %v287 = vadd.f32 0.0, %v286
  %v288 = vpop.f32.mrf.mxu0
  %289 = vmatprep.mubr.bf16.mxu0 0
  %290 = vmatmul.mubr.bf16.gmra.mxu0 %v144
  %v291 = vpop.f32.mrf.mxu0
  %v292 = vadd.f32 0.0, %v291
  %v293 = vpop.f32.mrf.mxu0
  %v294 = vpop.f32.mrf.mxu0
  %v295 = vadd.f32 0.0, %v294
  %v296 = vpop.f32.mrf.mxu0
  %297 = vdwg.mxu0
  %v298 = vadd.f32 %v73, %v236
  %v299 = vadd.f32 %v74, %v239
  %v300 = vadd.f32 %v75, %v244
  %v301 = vadd.f32 %v76, %v247
  %v302 = vadd.f32 %v77, %v252
  %v303 = vadd.f32 %v78, %v255
  %v304 = vadd.f32 %v79, %v260
  %v305 = vadd.f32 %v80, %v263
  %v306 = vadd.f32 %v81, %v268
  %v307 = vadd.f32 %v82, %v271
  %v308 = vadd.f32 %v83, %v276
  %v309 = vadd.f32 %v84, %v279
  %v310 = vadd.f32 %v85, %v284
  %v311 = vadd.f32 %v86, %v287
  %v312 = vadd.f32 %v87, %v292
  %v313 = vadd.f32 %v88, %v295
  %314 = vst [vmem:[#allocation2] sm:$0xff] %v298
  %315 = vst [vmem:[#allocation2 + $0x8] sm:$0xff] %v299
  %316 = vst [vmem:[#allocation2 + $0x10] sm:$0xff] %v300
  %317 = vst [vmem:[#allocation2 + $0x18] sm:$0xff] %v301
  %318 = vst [vmem:[#allocation2 + $0x20] sm:$0xff] %v302
  %319 = vst [vmem:[#allocation2 + $0x28] sm:$0xff] %v303
  %320 = vst [vmem:[#allocation2 + $0x30] sm:$0xff] %v304
  %321 = vst [vmem:[#allocation2 + $0x38] sm:$0xff] %v305
  %322 = vst [vmem:[#allocation2 + $0x40] sm:$0xff] %v306
  %323 = vst [vmem:[#allocation2 + $0x48] sm:$0xff] %v307
  %324 = vst [vmem:[#allocation2 + $0x50] sm:$0xff] %v308
  %325 = vst [vmem:[#allocation2 + $0x58] sm:$0xff] %v309
  %326 = vst [vmem:[#allocation2 + $0x60] sm:$0xff] %v310
  %327 = vst [vmem:[#allocation2 + $0x68] sm:$0xff] %v311
  %328 = vst [vmem:[#allocation2 + $0x70] sm:$0xff] %v312
  %329 = vst [vmem:[#allocation2 + $0x78] sm:$0xff] %v313
  // Predicated region
  $region38: #{graph_autoencoder_apply.7} parent=0 // pred_check
    %p330 = pneg %p32
  $region39: #{graph_autoencoder_apply.7} parent=0 // pred_check_branch
    %332 = sbr.rel (%p330) target = $region41
  $region40: #{graph_autoencoder_apply.7} parent=0 // pred_region
    %v333 = vld [vmem:[#allocation2] sm:$0xff]
    %v334 = vld [vmem:[#allocation2 + $0x8] sm:$0xff]
    %v335 = vld [vmem:[#allocation2 + $0x10] sm:$0xff]
    %v336 = vld [vmem:[#allocation2 + $0x18] sm:$0xff]
    %v337 = vld [vmem:[#allocation2 + $0x20] sm:$0xff]
    %v338 = vld [vmem:[#allocation2 + $0x28] sm:$0xff]
    %v339 = vld [vmem:[#allocation2 + $0x30] sm:$0xff]
    %v340 = vld [vmem:[#allocation2 + $0x38] sm:$0xff]
    %v341 = vld [vmem:[#allocation2 + $0x40] sm:$0xff]
    %v342 = vld [vmem:[#allocation2 + $0x48] sm:$0xff]
    %v343 = vld [vmem:[#allocation2 + $0x50] sm:$0xff]
    %v344 = vld [vmem:[#allocation2 + $0x58] sm:$0xff]
    %v345 = vld [vmem:[#allocation2 + $0x60] sm:$0xff]
    %v346 = vld [vmem:[#allocation2 + $0x68] sm:$0xff]
    %v347 = vld [vmem:[#allocation2 + $0x70] sm:$0xff]
    %v348 = vld [vmem:[#allocation2 + $0x78] sm:$0xff]
    %v349 = vld [vmem:[%s3] sm:$0xff]
    %v350 = vld [vmem:[%s3 + $0x8] sm:$0xff]
    %v351 = vld [vmem:[%s3 + $0x10] sm:$0xff]
    %v352 = vld [vmem:[%s3 + $0x18] sm:$0xff]
    %v353 = vld [vmem:[%s3 + $0x20] sm:$0xff]
    %v354 = vld [vmem:[%s3 + $0x28] sm:$0xff]
    %v355 = vld [vmem:[%s3 + $0x30] sm:$0xff]
    %v356 = vld [vmem:[%s3 + $0x38] sm:$0xff]
    %v357 = vld [vmem:[%s3 + $0x40] sm:$0xff]
    %v358 = vld [vmem:[%s3 + $0x48] sm:$0xff]
    %v359 = vld [vmem:[%s3 + $0x50] sm:$0xff]
    %v360 = vld [vmem:[%s3 + $0x58] sm:$0xff]
    %v361 = vld [vmem:[%s3 + $0x60] sm:$0xff]
    %v362 = vld [vmem:[%s3 + $0x68] sm:$0xff]
    %v363 = vld [vmem:[%s3 + $0x70] sm:$0xff]
    %v364 = vld [vmem:[%s3 + $0x78] sm:$0xff]
    %366 = vset.pattern.permute.xlu0 0
    %367 = vperm.xlu0 %366, %v349
    %v368 = vpop.permute.xlu0 %367
    %371 = vset.pattern.permute.xlu0 0
    %372 = vperm.xlu0 %371, %v350
    %v373 = vpop.permute.xlu0 %372
    %376 = vset.pattern.permute.xlu0 0
    %377 = vperm.xlu0 %376, %v351
    %v378 = vpop.permute.xlu0 %377
    %381 = vset.pattern.permute.xlu0 0
    %382 = vperm.xlu0 %381, %v352
    %v383 = vpop.permute.xlu0 %382
    %386 = vset.pattern.permute.xlu0 0
    %387 = vperm.xlu0 %386, %v353
    %v388 = vpop.permute.xlu0 %387
    %391 = vset.pattern.permute.xlu0 0
    %392 = vperm.xlu0 %391, %v354
    %v393 = vpop.permute.xlu0 %392
    %396 = vset.pattern.permute.xlu0 0
    %397 = vperm.xlu0 %396, %v355
    %v398 = vpop.permute.xlu0 %397
    %401 = vset.pattern.permute.xlu0 0
    %402 = vperm.xlu0 %401, %v356
    %v403 = vpop.permute.xlu0 %402
    %406 = vset.pattern.permute.xlu0 0
    %407 = vperm.xlu0 %406, %v357
    %v408 = vpop.permute.xlu0 %407
    %411 = vset.pattern.permute.xlu0 0
    %412 = vperm.xlu0 %411, %v358
    %v413 = vpop.permute.xlu0 %412
    %416 = vset.pattern.permute.xlu0 0
    %417 = vperm.xlu0 %416, %v359
    %v418 = vpop.permute.xlu0 %417
    %421 = vset.pattern.permute.xlu0 0
    %422 = vperm.xlu0 %421, %v360
    %v423 = vpop.permute.xlu0 %422
    %426 = vset.pattern.permute.xlu0 0
    %427 = vperm.xlu0 %426, %v361
    %v428 = vpop.permute.xlu0 %427
    %431 = vset.pattern.permute.xlu0 0
    %432 = vperm.xlu0 %431, %v362
    %v433 = vpop.permute.xlu0 %432
    %436 = vset.pattern.permute.xlu0 0
    %437 = vperm.xlu0 %436, %v363
    %v438 = vpop.permute.xlu0 %437
    %441 = vset.pattern.permute.xlu0 0
    %442 = vperm.xlu0 %441, %v364
    %v443 = vpop.permute.xlu0 %442
    %v445 = vmul.f32 %v333, %v368
    %v446 = vmul.f32 %v334, %v373
    %v447 = vmul.f32 %v335, %v378
    %v448 = vmul.f32 %v336, %v383
    %v449 = vmul.f32 %v337, %v388
    %v450 = vmul.f32 %v338, %v393
    %v451 = vmul.f32 %v339, %v398
    %v452 = vmul.f32 %v340, %v403
    %v453 = vmul.f32 %v341, %v408
    %v454 = vmul.f32 %v342, %v413
    %v455 = vmul.f32 %v343, %v418
    %v456 = vmul.f32 %v344, %v423
    %v457 = vmul.f32 %v345, %v428
    %v458 = vmul.f32 %v346, %v433
    %v459 = vmul.f32 %v347, %v438
    %v460 = vmul.f32 %v348, %v443
    %v461 = vmax.f32 %v445, 0.0
    %v462 = vmax.f32 %v446, 0.0
    %v463 = vmax.f32 %v447, 0.0
    %v464 = vmax.f32 %v448, 0.0
    %v465 = vmax.f32 %v449, 0.0
    %v466 = vmax.f32 %v450, 0.0
    %v467 = vmax.f32 %v451, 0.0
    %v468 = vmax.f32 %v452, 0.0
    %v469 = vmax.f32 %v453, 0.0
    %v470 = vmax.f32 %v454, 0.0
    %v471 = vmax.f32 %v455, 0.0
    %v472 = vmax.f32 %v456, 0.0
    %v473 = vmax.f32 %v457, 0.0
    %v474 = vmax.f32 %v458, 0.0
    %v475 = vmax.f32 %v459, 0.0
    %v476 = vmax.f32 %v460, 0.0
    %v477 = vld [vmem:[%s2] sm:$0xf]
    %v478 = vld [vmem:[%s2 + $0x4] sm:$0xf]
    %v479 = vld [vmem:[%s2 + $0x8] sm:$0xf]
    %v480 = vld [vmem:[%s2 + $0xc] sm:$0xf]
    %v481 = vld [vmem:[%s2 + $0x10] sm:$0xf]
    %v482 = vld [vmem:[%s2 + $0x14] sm:$0xf]
    %v483 = vld [vmem:[%s2 + $0x18] sm:$0xf]
    %v484 = vld [vmem:[%s2 + $0x1c] sm:$0xf]
    %v485 = vld [vmem:[%s2 + $0x20] sm:$0xf]
    %v486 = vld [vmem:[%s2 + $0x24] sm:$0xf]
    %v487 = vld [vmem:[%s2 + $0x28] sm:$0xf]
    %v488 = vld [vmem:[%s2 + $0x2c] sm:$0xf]
    %v489 = vld [vmem:[%s2 + $0x30] sm:$0xf]
    %v490 = vld [vmem:[%s2 + $0x34] sm:$0xf]
    %v491 = vld [vmem:[%s2 + $0x38] sm:$0xf]
    %v492 = vld [vmem:[%s2 + $0x3c] sm:$0xf]
    %v493 = vunpack.c.l.bf16 %v477
    %v494 = vunpack.c.l.bf16 %v478
    %v495 = vunpack.c.l.bf16 %v479
    %v496 = vunpack.c.l.bf16 %v480
    %v497 = vunpack.c.l.bf16 %v481
    %v498 = vunpack.c.l.bf16 %v482
    %v499 = vunpack.c.l.bf16 %v483
    %v500 = vunpack.c.l.bf16 %v484
    %v501 = vunpack.c.l.bf16 %v485
    %v502 = vunpack.c.l.bf16 %v486
    %v503 = vunpack.c.l.bf16 %v487
    %v504 = vunpack.c.l.bf16 %v488
    %v505 = vunpack.c.l.bf16 %v489
    %v506 = vunpack.c.l.bf16 %v490
    %v507 = vunpack.c.l.bf16 %v491
    %v508 = vunpack.c.l.bf16 %v492
    %v509 = vadd.f32 %v461, %v493
    %v510 = vadd.f32 %v462, %v494
    %v511 = vadd.f32 %v463, %v495
    %v512 = vadd.f32 %v464, %v496
    %v513 = vadd.f32 %v465, %v497
    %v514 = vadd.f32 %v466, %v498
    %v515 = vadd.f32 %v467, %v499
    %v516 = vadd.f32 %v468, %v500
    %v517 = vadd.f32 %v469, %v501
    %v518 = vadd.f32 %v470, %v502
    %v519 = vadd.f32 %v471, %v503
    %v520 = vadd.f32 %v472, %v504
    %v521 = vadd.f32 %v473, %v505
    %v522 = vadd.f32 %v474, %v506
    %v523 = vadd.f32 %v475, %v507
    %v524 = vadd.f32 %v476, %v508
    %525 = vst [vmem:[%s9] sm:$0xff] %v509
    %526 = vst [vmem:[%s9 + $0x8] sm:$0xff] %v510
    %527 = vst [vmem:[%s9 + $0x10] sm:$0xff] %v511
    %528 = vst [vmem:[%s9 + $0x18] sm:$0xff] %v512
    %529 = vst [vmem:[%s9 + $0x20] sm:$0xff] %v513
    %530 = vst [vmem:[%s9 + $0x28] sm:$0xff] %v514
    %531 = vst [vmem:[%s9 + $0x30] sm:$0xff] %v515
    %532 = vst [vmem:[%s9 + $0x38] sm:$0xff] %v516
    %533 = vst [vmem:[%s9 + $0x40] sm:$0xff] %v517
    %534 = vst [vmem:[%s9 + $0x48] sm:$0xff] %v518
    %535 = vst [vmem:[%s9 + $0x50] sm:$0xff] %v519
    %536 = vst [vmem:[%s9 + $0x58] sm:$0xff] %v520
    %537 = vst [vmem:[%s9 + $0x60] sm:$0xff] %v521
    %538 = vst [vmem:[%s9 + $0x68] sm:$0xff] %v522
    %539 = vst [vmem:[%s9 + $0x70] sm:$0xff] %v523
    %540 = vst [vmem:[%s9 + $0x78] sm:$0xff] %v524
    %v541 = vpack.c.bf16 %v510, %v509
    %v542 = vpack.c.bf16 %v512, %v511
    %v543 = vpack.c.bf16 %v514, %v513
    %v544 = vpack.c.bf16 %v516, %v515
    %v545 = vpack.c.bf16 %v518, %v517
    %v546 = vpack.c.bf16 %v520, %v519
    %v547 = vpack.c.bf16 %v522, %v521
    %v548 = vpack.c.bf16 %v524, %v523
    %v549 = vld [vmem:[%s4] sm:$0xf]
    %v550 = vld [vmem:[%s4 + $0x4] sm:$0xf]
    %v551 = vld [vmem:[%s4 + $0x8] sm:$0xf]
    %v552 = vld [vmem:[%s4 + $0xc] sm:$0xf]
    %v553 = vld [vmem:[%s4 + $0x10] sm:$0xf]
    %v554 = vld [vmem:[%s4 + $0x14] sm:$0xf]
    %v555 = vld [vmem:[%s4 + $0x18] sm:$0xf]
    %v556 = vld [vmem:[%s4 + $0x1c] sm:$0xf]
    %v557 = vld [vmem:[%s4 + $0x20] sm:$0xf]
    %v558 = vld [vmem:[%s4 + $0x24] sm:$0xf]
    %v559 = vld [vmem:[%s4 + $0x28] sm:$0xf]
    %v560 = vld [vmem:[%s4 + $0x2c] sm:$0xf]
    %v561 = vld [vmem:[%s4 + $0x30] sm:$0xf]
    %v562 = vld [vmem:[%s4 + $0x34] sm:$0xf]
    %v563 = vld [vmem:[%s4 + $0x38] sm:$0xf]
    %v564 = vld [vmem:[%s4 + $0x3c] sm:$0xf]
    %v565 = vld [vmem:[%s5] sm:$0x1]
    %v567 = vlaneseq
    %v568 = vshrl.u32 %v567, 7
    %v569 = vsub.s32 0, %v568
    %v570 = vrot.slane %v565, %v569
    %v588 = vunpack.c.l.b16 %v549
    %v589 = vunpack.c.l.b16 %v550
    %v590 = vunpack.c.l.b16 %v551
    %v591 = vunpack.c.l.b16 %v552
    %v592 = vunpack.c.l.b16 %v553
    %v593 = vunpack.c.l.b16 %v554
    %v594 = vunpack.c.l.b16 %v555
    %v595 = vunpack.c.l.b16 %v556
    %v596 = vunpack.c.l.b16 %v557
    %v597 = vunpack.c.l.b16 %v558
    %v598 = vunpack.c.l.b16 %v559
    %v599 = vunpack.c.l.b16 %v560
    %v600 = vunpack.c.l.b16 %v561
    %v601 = vunpack.c.l.b16 %v562
    %v602 = vunpack.c.l.b16 %v563
    %v603 = vunpack.c.l.b16 %v564
    %v604 = vpack.c.b16 %v589, %v588
    %v605 = vpack.c.b16 %v591, %v590
    %v606 = vpack.c.b16 %v593, %v592
    %v607 = vpack.c.b16 %v595, %v594
    %v608 = vpack.c.b16 %v597, %v596
    %v609 = vpack.c.b16 %v599, %v598
    %v610 = vpack.c.b16 %v601, %v600
    %v611 = vpack.c.b16 %v603, %v602
    %620 = vmatprep.subr.bf16.mxu0 0
    %621 = vmatpush1.bf16.msra.mxu0 %v611
    %622 = vmatprep.subr.bf16.mxu0 0
    %623 = vmatpush1.bf16.msra.mxu0 %v610
    %624 = vmatprep.subr.bf16.mxu0 0
    %625 = vmatpush1.bf16.msra.mxu0 %v609
    %626 = vmatprep.subr.bf16.mxu0 0
    %627 = vmatpush1.bf16.msra.mxu0 %v608
    %628 = vmatprep.subr.bf16.mxu0 0
    %629 = vmatpush1.bf16.msra.mxu0 %v607
    %630 = vmatprep.subr.bf16.mxu0 0
    %631 = vmatpush1.bf16.msra.mxu0 %v606
    %632 = vmatprep.subr.bf16.mxu0 0
    %633 = vmatpush1.bf16.msra.mxu0 %v605
    %634 = vmatprep.subr.bf16.mxu0 0
    %635 = vmatpush1.bf16.msra.mxu0 %v604
    %636 = vmatprep.subr.bf16.mxu0 0
    %637 = vmatpush2.bf16.msra.mxu0 0
    %638 = vmatprep.subr.bf16.mxu0 0
    %639 = vmatpush2.bf16.msra.mxu0 0
    %640 = vmatprep.subr.bf16.mxu0 0
    %641 = vmatpush2.bf16.msra.mxu0 0
    %642 = vmatprep.subr.bf16.mxu0 0
    %643 = vmatpush2.bf16.msra.mxu0 0
    %644 = vmatprep.subr.bf16.mxu0 0
    %645 = vmatpush2.bf16.msra.mxu0 0
    %646 = vmatprep.subr.bf16.mxu0 0
    %647 = vmatpush2.bf16.msra.mxu0 0
    %648 = vmatprep.subr.bf16.mxu0 0
    %649 = vmatpush2.bf16.msra.mxu0 0
    %650 = vmatprep.subr.bf16.mxu0 0
    %651 = vmatpush2.bf16.msra.mxu0 0
    %652 = vmatprep.mubr.bf16.mxu0 0
    %653 = vmatmul.mubr.bf16.gmra.mxu0 %v541
    %v654 = vpop.f32.mrf.mxu0
    %v655 = vadd.f32 %v570, %v654
    %v656 = vpop.f32.mrf.mxu0
    %v657 = vpop.f32.mrf.mxu0
    %v658 = vadd.f32 %v570, %v657
    %v659 = vpop.f32.mrf.mxu0
    %660 = vmatprep.mubr.bf16.mxu0 0
    %661 = vmatmul.mubr.bf16.gmra.mxu0 %v542
    %v662 = vpop.f32.mrf.mxu0
    %v663 = vadd.f32 %v570, %v662
    %v664 = vpop.f32.mrf.mxu0
    %v665 = vpop.f32.mrf.mxu0
    %v666 = vadd.f32 %v570, %v665
    %v667 = vpop.f32.mrf.mxu0
    %668 = vmatprep.mubr.bf16.mxu0 0
    %669 = vmatmul.mubr.bf16.gmra.mxu0 %v543
    %v670 = vpop.f32.mrf.mxu0
    %v671 = vadd.f32 %v570, %v670
    %v672 = vpop.f32.mrf.mxu0
    %v673 = vpop.f32.mrf.mxu0
    %v674 = vadd.f32 %v570, %v673
    %v675 = vpop.f32.mrf.mxu0
    %676 = vmatprep.mubr.bf16.mxu0 0
    %677 = vmatmul.mubr.bf16.gmra.mxu0 %v544
    %v678 = vpop.f32.mrf.mxu0
    %v679 = vadd.f32 %v570, %v678
    %v680 = vpop.f32.mrf.mxu0
    %v681 = vpop.f32.mrf.mxu0
    %v682 = vadd.f32 %v570, %v681
    %v683 = vpop.f32.mrf.mxu0
    %684 = vmatprep.mubr.bf16.mxu0 0
    %685 = vmatmul.mubr.bf16.gmra.mxu0 %v545
    %v686 = vpop.f32.mrf.mxu0
    %v687 = vadd.f32 %v570, %v686
    %v688 = vpop.f32.mrf.mxu0
    %v689 = vpop.f32.mrf.mxu0
    %v690 = vadd.f32 %v570, %v689
    %v691 = vpop.f32.mrf.mxu0
    %692 = vmatprep.mubr.bf16.mxu0 0
    %693 = vmatmul.mubr.bf16.gmra.mxu0 %v546
    %v694 = vpop.f32.mrf.mxu0
    %v695 = vadd.f32 %v570, %v694
    %v696 = vpop.f32.mrf.mxu0
    %v697 = vpop.f32.mrf.mxu0
    %v698 = vadd.f32 %v570, %v697
    %v699 = vpop.f32.mrf.mxu0
    %700 = vmatprep.mubr.bf16.mxu0 0
    %701 = vmatmul.mubr.bf16.gmra.mxu0 %v547
    %v702 = vpop.f32.mrf.mxu0
    %v703 = vadd.f32 %v570, %v702
    %v704 = vpop.f32.mrf.mxu0
    %v705 = vpop.f32.mrf.mxu0
    %v706 = vadd.f32 %v570, %v705
    %v707 = vpop.f32.mrf.mxu0
    %708 = vmatprep.mubr.bf16.mxu0 0
    %709 = vmatmul.mubr.bf16.gmra.mxu0 %v548
    %v710 = vpop.f32.mrf.mxu0
    %v711 = vadd.f32 %v570, %v710
    %v712 = vpop.f32.mrf.mxu0
    %v713 = vpop.f32.mrf.mxu0
    %v714 = vadd.f32 %v570, %v713
    %v715 = vpop.f32.mrf.mxu0
    %716 = vdwg.mxu0
    %v717 = vmax.f32 %v655, 0.0
    %v718 = vmax.f32 %v658, 0.0
    %v719 = vmax.f32 %v663, 0.0
    %v720 = vmax.f32 %v666, 0.0
    %v721 = vmax.f32 %v671, 0.0
    %v722 = vmax.f32 %v674, 0.0
    %v723 = vmax.f32 %v679, 0.0
    %v724 = vmax.f32 %v682, 0.0
    %v725 = vmax.f32 %v687, 0.0
    %v726 = vmax.f32 %v690, 0.0
    %v727 = vmax.f32 %v695, 0.0
    %v728 = vmax.f32 %v698, 0.0
    %v729 = vmax.f32 %v703, 0.0
    %v730 = vmax.f32 %v706, 0.0
    %v731 = vmax.f32 %v711, 0.0
    %v732 = vmax.f32 %v714, 0.0
    %v733 = vpack.c.bf16 %v718, %v717
    %v734 = vpack.c.bf16 %v720, %v719
    %v735 = vpack.c.bf16 %v722, %v721
    %v736 = vpack.c.bf16 %v724, %v723
    %v737 = vpack.c.bf16 %v726, %v725
    %v738 = vpack.c.bf16 %v728, %v727
    %v739 = vpack.c.bf16 %v730, %v729
    %v740 = vpack.c.bf16 %v732, %v731
    %v741 = vld [vmem:[%s6] sm:$0xf]
    %v742 = vld [vmem:[%s6 + $0x4] sm:$0xf]
    %v743 = vld [vmem:[%s6 + $0x8] sm:$0xf]
    %v744 = vld [vmem:[%s6 + $0xc] sm:$0xf]
    %v745 = vld [vmem:[%s6 + $0x10] sm:$0xf]
    %v746 = vld [vmem:[%s6 + $0x14] sm:$0xf]
    %v747 = vld [vmem:[%s6 + $0x18] sm:$0xf]
    %v748 = vld [vmem:[%s6 + $0x1c] sm:$0xf]
    %v749 = vld [vmem:[%s6 + $0x20] sm:$0xf]
    %v750 = vld [vmem:[%s6 + $0x24] sm:$0xf]
    %v751 = vld [vmem:[%s6 + $0x28] sm:$0xf]
    %v752 = vld [vmem:[%s6 + $0x2c] sm:$0xf]
    %v753 = vld [vmem:[%s6 + $0x30] sm:$0xf]
    %v754 = vld [vmem:[%s6 + $0x34] sm:$0xf]
    %v755 = vld [vmem:[%s6 + $0x38] sm:$0xf]
    %v756 = vld [vmem:[%s6 + $0x3c] sm:$0xf]
    %v757 = vld [vmem:[%s7] sm:$0x1]
    %v759 = vlaneseq
    %v760 = vshrl.u32 %v759, 7
    %v761 = vsub.s32 0, %v760
    %v762 = vrot.slane %v757, %v761
    %v780 = vunpack.c.l.b16 %v741
    %v781 = vunpack.c.l.b16 %v742
    %v782 = vunpack.c.l.b16 %v743
    %v783 = vunpack.c.l.b16 %v744
    %v784 = vunpack.c.l.b16 %v745
    %v785 = vunpack.c.l.b16 %v746
    %v786 = vunpack.c.l.b16 %v747
    %v787 = vunpack.c.l.b16 %v748
    %v788 = vunpack.c.l.b16 %v749
    %v789 = vunpack.c.l.b16 %v750
    %v790 = vunpack.c.l.b16 %v751
    %v791 = vunpack.c.l.b16 %v752
    %v792 = vunpack.c.l.b16 %v753
    %v793 = vunpack.c.l.b16 %v754
    %v794 = vunpack.c.l.b16 %v755
    %v795 = vunpack.c.l.b16 %v756
    %v796 = vpack.c.b16 %v781, %v780
    %v797 = vpack.c.b16 %v783, %v782
    %v798 = vpack.c.b16 %v785, %v784
    %v799 = vpack.c.b16 %v787, %v786
    %v800 = vpack.c.b16 %v789, %v788
    %v801 = vpack.c.b16 %v791, %v790
    %v802 = vpack.c.b16 %v793, %v792
    %v803 = vpack.c.b16 %v795, %v794
    %812 = vmatprep.subr.bf16.mxu0 0
    %813 = vmatpush1.bf16.msra.mxu0 %v803
    %814 = vmatprep.subr.bf16.mxu0 0
    %815 = vmatpush1.bf16.msra.mxu0 %v802
    %816 = vmatprep.subr.bf16.mxu0 0
    %817 = vmatpush1.bf16.msra.mxu0 %v801
    %818 = vmatprep.subr.bf16.mxu0 0
    %819 = vmatpush1.bf16.msra.mxu0 %v800
    %820 = vmatprep.subr.bf16.mxu0 0
    %821 = vmatpush1.bf16.msra.mxu0 %v799
    %822 = vmatprep.subr.bf16.mxu0 0
    %823 = vmatpush1.bf16.msra.mxu0 %v798
    %824 = vmatprep.subr.bf16.mxu0 0
    %825 = vmatpush1.bf16.msra.mxu0 %v797
    %826 = vmatprep.subr.bf16.mxu0 0
    %827 = vmatpush1.bf16.msra.mxu0 %v796
    %828 = vmatprep.subr.bf16.mxu0 0
    %829 = vmatpush2.bf16.msra.mxu0 0
    %830 = vmatprep.subr.bf16.mxu0 0
    %831 = vmatpush2.bf16.msra.mxu0 0
    %832 = vmatprep.subr.bf16.mxu0 0
    %833 = vmatpush2.bf16.msra.mxu0 0
    %834 = vmatprep.subr.bf16.mxu0 0
    %835 = vmatpush2.bf16.msra.mxu0 0
    %836 = vmatprep.subr.bf16.mxu0 0
    %837 = vmatpush2.bf16.msra.mxu0 0
    %838 = vmatprep.subr.bf16.mxu0 0
    %839 = vmatpush2.bf16.msra.mxu0 0
    %840 = vmatprep.subr.bf16.mxu0 0
    %841 = vmatpush2.bf16.msra.mxu0 0
    %842 = vmatprep.subr.bf16.mxu0 0
    %843 = vmatpush2.bf16.msra.mxu0 0
    %844 = vmatprep.mubr.bf16.mxu0 0
    %845 = vmatmul.mubr.bf16.gmra.mxu0 %v733
    %v846 = vpop.f32.mrf.mxu0
    %v847 = vadd.f32 %v762, %v846
    %v848 = vpop.f32.mrf.mxu0
    %v849 = vpop.f32.mrf.mxu0
    %v850 = vadd.f32 %v762, %v849
    %v851 = vpop.f32.mrf.mxu0
    %852 = vmatprep.mubr.bf16.mxu0 0
    %853 = vmatmul.mubr.bf16.gmra.mxu0 %v734
    %v854 = vpop.f32.mrf.mxu0
    %v855 = vadd.f32 %v762, %v854
    %v856 = vpop.f32.mrf.mxu0
    %v857 = vpop.f32.mrf.mxu0
    %v858 = vadd.f32 %v762, %v857
    %v859 = vpop.f32.mrf.mxu0
    %860 = vmatprep.mubr.bf16.mxu0 0
    %861 = vmatmul.mubr.bf16.gmra.mxu0 %v735
    %v862 = vpop.f32.mrf.mxu0
    %v863 = vadd.f32 %v762, %v862
    %v864 = vpop.f32.mrf.mxu0
    %v865 = vpop.f32.mrf.mxu0
    %v866 = vadd.f32 %v762, %v865
    %v867 = vpop.f32.mrf.mxu0
    %868 = vmatprep.mubr.bf16.mxu0 0
    %869 = vmatmul.mubr.bf16.gmra.mxu0 %v736
    %v870 = vpop.f32.mrf.mxu0
    %v871 = vadd.f32 %v762, %v870
    %v872 = vpop.f32.mrf.mxu0
    %v873 = vpop.f32.mrf.mxu0
    %v874 = vadd.f32 %v762, %v873
    %v875 = vpop.f32.mrf.mxu0
    %876 = vmatprep.mubr.bf16.mxu0 0
    %877 = vmatmul.mubr.bf16.gmra.mxu0 %v737
    %v878 = vpop.f32.mrf.mxu0
    %v879 = vadd.f32 %v762, %v878
    %v880 = vpop.f32.mrf.mxu0
    %v881 = vpop.f32.mrf.mxu0
    %v882 = vadd.f32 %v762, %v881
    %v883 = vpop.f32.mrf.mxu0
    %884 = vmatprep.mubr.bf16.mxu0 0
    %885 = vmatmul.mubr.bf16.gmra.mxu0 %v738
    %v886 = vpop.f32.mrf.mxu0
    %v887 = vadd.f32 %v762, %v886
    %v888 = vpop.f32.mrf.mxu0
    %v889 = vpop.f32.mrf.mxu0
    %v890 = vadd.f32 %v762, %v889
    %v891 = vpop.f32.mrf.mxu0
    %892 = vmatprep.mubr.bf16.mxu0 0
    %893 = vmatmul.mubr.bf16.gmra.mxu0 %v739
    %v894 = vpop.f32.mrf.mxu0
    %v895 = vadd.f32 %v762, %v894
    %v896 = vpop.f32.mrf.mxu0
    %v897 = vpop.f32.mrf.mxu0
    %v898 = vadd.f32 %v762, %v897
    %v899 = vpop.f32.mrf.mxu0
    %900 = vmatprep.mubr.bf16.mxu0 0
    %901 = vmatmul.mubr.bf16.gmra.mxu0 %v740
    %v902 = vpop.f32.mrf.mxu0
    %v903 = vadd.f32 %v762, %v902
    %v904 = vpop.f32.mrf.mxu0
    %v905 = vpop.f32.mrf.mxu0
    %v906 = vadd.f32 %v762, %v905
    %v907 = vpop.f32.mrf.mxu0
    %908 = vdwg.mxu0
    %909 = vst [vmem:[%s8] sm:$0xff] %v847
    %910 = vst [vmem:[%s8 + $0x8] sm:$0xff] %v850
    %911 = vst [vmem:[%s8 + $0x10] sm:$0xff] %v855
    %912 = vst [vmem:[%s8 + $0x18] sm:$0xff] %v858
    %913 = vst [vmem:[%s8 + $0x20] sm:$0xff] %v863
    %914 = vst [vmem:[%s8 + $0x28] sm:$0xff] %v866
    %915 = vst [vmem:[%s8 + $0x30] sm:$0xff] %v871
    %916 = vst [vmem:[%s8 + $0x38] sm:$0xff] %v874
    %917 = vst [vmem:[%s8 + $0x40] sm:$0xff] %v879
    %918 = vst [vmem:[%s8 + $0x48] sm:$0xff] %v882
    %919 = vst [vmem:[%s8 + $0x50] sm:$0xff] %v887
    %920 = vst [vmem:[%s8 + $0x58] sm:$0xff] %v890
    %921 = vst [vmem:[%s8 + $0x60] sm:$0xff] %v895
    %922 = vst [vmem:[%s8 + $0x68] sm:$0xff] %v898
    %923 = vst [vmem:[%s8 + $0x70] sm:$0xff] %v903
    %924 = vst [vmem:[%s8 + $0x78] sm:$0xff] %v906
  $region41: #{graph_autoencoder_apply.7} parent=0 // pred_fallthru
    _
  // Predicated region
  $region42: #{graph_autoencoder_apply.7} parent=0 // pred_check
    _
  $region43: #{graph_autoencoder_apply.7} parent=0 // pred_check_branch
    %926 = sbr.rel (0) target = $region45
  $region44: #{graph_autoencoder_apply.7} parent=0 // pred_region
    _
  $region45: #{graph_autoencoder_apply.7} parent=0 // pred_fallthru
    _
  // Predicated region
  $region46: #{graph_autoencoder_apply.7} parent=0 // pred_check
    _
  $region47: #{graph_autoencoder_apply.7} parent=0 // pred_check_branch
    %928 = sbr.rel (0) target = $region49
  $region48: #{graph_autoencoder_apply.7} parent=0 // pred_region
    _
  $region49: #{graph_autoencoder_apply.7} parent=0 // pred_fallthru
    _
  // Predicated region
  $region50: #{graph_autoencoder_apply.7} parent=0 // pred_check
    _
  $region51: #{graph_autoencoder_apply.7} parent=0 // pred_check_branch
    %930 = sbr.rel (0) target = $region53
  $region52: #{graph_autoencoder_apply.7} parent=0 // pred_region
    _
  $region53: #{graph_autoencoder_apply.7} parent=0 // pred_fallthru
    _
  // Predicated region
  $region54: #{graph_autoencoder_apply.7} parent=0 // pred_check
    _
  $region55: #{graph_autoencoder_apply.7} parent=0 // pred_check_branch
    %932 = sbr.rel (0) target = $region57
  $region56: #{graph_autoencoder_apply.7} parent=0 // pred_region
    _
  $region57: #{graph_autoencoder_apply.7} parent=0 // pred_fallthru
    _

</llo_original>
